<compile_context>
chip_gen: v7x
topology: tpu7x:2x2x1
jax: 0.10.0
libtpu: 0.0.40
codegen_flags: <defaults>
</compile_context>

<pallas_src>
import functools

import jax
import jax.numpy as jnp
from jax.experimental import pallas as pl
from jax.experimental.pallas import tpu as pltpu

LANES = 128
SUBL = 16  # row granularity used so bf16-packed tiles stay clean


def _round_up(n, m):
    return ((n + m - 1) // m) * m


def _pad_axis(a, axis, target):
    if a.shape[axis] == target:
        return a
    pad = [(0, 0)] * a.ndim
    pad[axis] = (0, target - a.shape[axis])
    return jnp.pad(a, pad)


# ---------------------------------------------------------------------------
# Fused conv + bias + ReLU + 2x2 maxpool kernel (one grid step per image)
# ---------------------------------------------------------------------------
def _conv_relu_pool_kernel(p_ref, w_ref, b_ref, o_ref, *, slab_rows):
    # p_ref: (1, 4*slab_rows, Kpad) bf16 im2col patches, four contiguous slabs
    #        (one per 2x2 pooling offset).  w_ref: (Kpad, 128) bf16.
    # b_ref: (1, 128) f32.  o_ref: (1, slab_rows, 128) bf16.
    y = jnp.dot(p_ref[0], w_ref[...], preferred_element_type=jnp.float32)
    y = jnp.maximum(y + b_ref[...], 0.0)
    r = slab_rows
    pooled = jnp.maximum(
        jnp.maximum(y[0 * r:1 * r], y[1 * r:2 * r]),
        jnp.maximum(y[2 * r:3 * r], y[3 * r:4 * r]),
    )
    o_ref[0] = pooled.astype(o_ref.dtype)


def conv_relu_pool(x_nhwc, w_oihw, b):
    """Valid conv (stride 1) + bias + ReLU + 2x2/stride-2 maxpool, fused.

    x_nhwc: (N, H, W, Cin) bf16.  w_oihw: (Cout, Cin, KH, KW) f32 (PyTorch layout).
    Returns (N, Hp, Wp, Cout) bf16, Hp = (H-KH+1)//2.
    """
    N, H, W, Cin = x_nhwc.shape
    Cout, Cin2, KH, KW = w_oihw.shape
    assert Cin == Cin2
    Ho, Wo = H - KH + 1, W - KW + 1
    Hp, Wp = Ho // 2, Wo // 2
    K = KH * KW * Cin
    Kpad = _round_up(K, LANES)
    r = _round_up(Hp * Wp, SUBL)  # rows per pooling slab, tile-aligned

    # im2col (column order (kh, kw, cin) matches the weight reshape below).
    # TODO(synk): build patches in-kernel from an NHWC tile to avoid the HBM-expanded
    # im2col copy once batch grows; acceptable at tiny batch.
    cols = jnp.stack(
        [x_nhwc[:, kh:kh + Ho, kw:kw + Wo, :] for kh in range(KH) for kw in range(KW)],
        axis=3,
    ).reshape(N, Ho, Wo, K)
    # Reorder conv-output rows into 4 contiguous slabs, one per (dh, dw) pooling offset,
    # so the in-kernel maxpool is 3 aligned elementwise maxes (row index = ph*Wp + pw).
    slabs = jnp.stack(
        [cols[:, dh::2, dw::2, :] for dh in range(2) for dw in range(2)],
        axis=1,
    ).reshape(N, 4, Hp * Wp, K)
    slabs = _pad_axis(_pad_axis(slabs, 2, r), 3, Kpad)                  # (N, 4, r, Kpad)
    patches = slabs.reshape(N, 4 * r, Kpad).astype(jnp.bfloat16)

    # (K, Cout) weight matrix, zero-padded to (Kpad, 128) -> lane-dense output.
    w_mat = jnp.transpose(w_oihw, (2, 3, 1, 0)).reshape(K, Cout)
    w_mat = _pad_axis(_pad_axis(w_mat, 0, Kpad), 1, LANES).astype(jnp.bfloat16)
    b_row = _pad_axis(b.reshape(1, Cout), 1, LANES).astype(jnp.float32)

    kernel = functools.partial(_conv_relu_pool_kernel, slab_rows=r)
    pooled = pl.pallas_call(
        kernel,
        out_shape=jax.ShapeDtypeStruct((N, r, LANES), jnp.bfloat16),
        grid=(N,),
        in_specs=[
            pl.BlockSpec((1, 4 * r, Kpad), lambda n: (n, 0, 0)),
            pl.BlockSpec((Kpad, LANES), lambda n: (0, 0)),
            pl.BlockSpec((1, LANES), lambda n: (0, 0)),
        ],
        out_specs=pl.BlockSpec((1, r, LANES), lambda n: (n, 0, 0)),
        compiler_params=pltpu.CompilerParams(dimension_semantics=("parallel",)),
    )(patches, w_mat, b_row)

    # Drop row / lane padding; pooled rows are ordered ph*Wp + pw.
    return pooled[:, :Hp * Wp, :Cout].reshape(N, Hp, Wp, Cout)


# ---------------------------------------------------------------------------
# Fused classifier: Linear+ReLU+Linear+ReLU+Linear in one kernel
# ---------------------------------------------------------------------------
def _mlp3_kernel(x_ref, w1_ref, b1_ref, w2_ref, b2_ref, w3_ref, b3_ref, o_ref):
    h = jnp.dot(x_ref[...], w1_ref[...], preferred_element_type=jnp.float32)
    h = jnp.maximum(h + b1_ref[...], 0.0).astype(jnp.bfloat16)
    h = jnp.dot(h, w2_ref[...], preferred_element_type=jnp.float32)
    h = jnp.maximum(h + b2_ref[...], 0.0).astype(jnp.bfloat16)
    h = jnp.dot(h, w3_ref[...], preferred_element_type=jnp.float32)
    o_ref[...] = (h + b3_ref[...]).astype(o_ref.dtype)


def mlp3(x, fc1_w, fc1_b, fc2_w, fc2_b, fc3_w, fc3_b):
    """x: (N, 400). Weights in PyTorch (out, in) layout. Intermediates never leave VMEM."""
    N, K = x.shape
    Kpad = _round_up(K, LANES)
    x_p = _pad_axis(x, 1, Kpad).astype(jnp.bfloat16)

    def wmat(w, kp):  # (out, in) -> zero-padded (kp, 128) bf16
        return _pad_axis(_pad_axis(w.T, 0, kp), 1, LANES).astype(jnp.bfloat16)

    def brow(b):
        return _pad_axis(b.reshape(1, -1), 1, LANES).astype(jnp.float32)

    w1, w2, w3 = wmat(fc1_w, Kpad), wmat(fc2_w, LANES), wmat(fc3_w, LANES)
    b1, b2, b3 = brow(fc1_b), brow(fc2_b), brow(fc3_b)

    out = pl.pallas_call(
        _mlp3_kernel,
        out_shape=jax.ShapeDtypeStruct((N, LANES), jnp.float32),
        in_specs=[
            pl.BlockSpec((N, Kpad), lambda: (0, 0)),
            pl.BlockSpec((Kpad, LANES), lambda: (0, 0)),
            pl.BlockSpec((1, LANES), lambda: (0, 0)),
            pl.BlockSpec((LANES, LANES), lambda: (0, 0)),
            pl.BlockSpec((1, LANES), lambda: (0, 0)),
            pl.BlockSpec((LANES, LANES), lambda: (0, 0)),
            pl.BlockSpec((1, LANES), lambda: (0, 0)),
        ],
        out_specs=pl.BlockSpec((N, LANES), lambda: (0, 0)),
    )(x_p, w1, b1, w2, b2, w3, b3)
    return out[:, :fc3_w.shape[0]]


# ---------------------------------------------------------------------------
# LeNetSequential forward
# ---------------------------------------------------------------------------
def lenet_forward(x_nchw, params):
    x = jnp.transpose(x_nchw, (0, 2, 3, 1)).astype(jnp.bfloat16)        # NCHW -> NHWC
    x = conv_relu_pool(x, params["conv1_w"], params["conv1_b"])         # (N,14,14,6)
    x = conv_relu_pool(x, params["conv2_w"], params["conv2_b"])         # (N,5,5,16)
    # flatten exactly like PyTorch x.view(N, -1) on NCHW tensors
    x = jnp.transpose(x, (0, 3, 1, 2)).reshape(x.shape[0], -1)          # (N, 400)
    return mlp3(x, params["fc1_w"], params["fc1_b"],
                params["fc2_w"], params["fc2_b"],
                params["fc3_w"], params["fc3_b"])


def init_params(key, classes):
    """Deterministic synthetic params; PyTorch layouts (OIHW conv, (out, in) fc)."""
    ks = jax.random.split(key, 10)

    def u(k, shape, fan_in):
        bound = 1.0 / (fan_in ** 0.5)
        return jax.random.uniform(k, shape, jnp.float32, -bound, bound)

    return {
        "conv1_w": u(ks[0], (6, 3, 5, 5), 3 * 5 * 5),
        "conv1_b": u(ks[1], (6,), 3 * 5 * 5),
        "conv2_w": u(ks[2], (16, 6, 5, 5), 6 * 5 * 5),
        "conv2_b": u(ks[3], (16,), 6 * 5 * 5),
        "fc1_w": u(ks[4], (120, 400), 400),
        "fc1_b": u(ks[5], (120,), 400),
        "fc2_w": u(ks[6], (84, 120), 120),
        "fc2_b": u(ks[7], (84,), 120),
        "fc3_w": u(ks[8], (classes, 84), 84),
        "fc3_b": u(ks[9], (classes,), 84),
    }


if __name__ == "__main__":
    classes = 10
    key = jax.random.PRNGKey(0)
    k_x, k_p = jax.random.split(key)

    # LeNet's 16*5*5 flatten fixes the spatial size at 32x32; small batch demo.
    x = jax.random.normal(k_x, (2, 3, 32, 32), jnp.float32)   # NCHW, like PyTorch
    params = init_params(k_p, classes)

    out = jax.jit(lenet_forward)(x, params)
    out = jax.block_until_ready(out)
    assert out.shape == (2, classes), out.shape
    assert out.dtype == jnp.float32
    print("KERNEL_OK")
</pallas_src>

<mosaic_0001>
module attributes {stable_mosaic.version = 11 : i64} {
  func.func @_conv_relu_pool_kernel(%arg0: i32, %arg1: memref<1x832x128xbf16, #tpu.memory_space<vmem>>, %arg2: memref<128x128xbf16, #tpu.memory_space<vmem>>, %arg3: memref<1x128xf32, #tpu.memory_space<vmem>>, %arg4: memref<1x208x128xbf16, #tpu.memory_space<vmem>>) attributes {dimension_semantics = [#tpu.dimension_semantics<parallel>], iteration_bounds = array<i64: 2>, scalar_prefetch = 0 : i64, scratch_operands = 0 : i64, tpu.core_type = #tpu.core_type<tc>, window_params = [{transform_indices = @transform_0, window_bounds = array<i64: 1, 832, 128>}, {pipeline_mode = #tpu.pipeline_mode<synchronous>, transform_indices = @transform_1, window_bounds = array<i64: 128, 128>}, {pipeline_mode = #tpu.pipeline_mode<synchronous>, transform_indices = @transform_2, window_bounds = array<i64: 1, 128>}, {transform_indices = @transform_3, window_bounds = array<i64: 1, 208, 128>}]} {
    %c0 = arith.constant 0 : index
    %c0_0 = arith.constant 0 : index
    %c0_1 = arith.constant 0 : index
    %0 = vector.load %arg1[%c0, %c0_0, %c0_1] : memref<1x832x128xbf16, #tpu.memory_space<vmem>>, vector<1x832x128xbf16>
    %1 = vector.shape_cast %0 : vector<1x832x128xbf16> to vector<832x128xbf16>
    %c0_2 = arith.constant 0 : index
    %c0_3 = arith.constant 0 : index
    %2 = vector.load %arg2[%c0_2, %c0_3] : memref<128x128xbf16, #tpu.memory_space<vmem>>, vector<128x128xbf16>
    %cst = arith.constant dense<0.000000e+00> : vector<832x128xf32>
    %3 = tpu.matmul %1, %2, %cst {dimension_numbers = #tpu.dot_dimension_numbers<[1], [0], [0], [1], [0, 0, 1, 1], [], []>} : vector<832x128xbf16>, vector<128x128xbf16>, vector<832x128xf32> -> vector<832x128xf32>
    %c0_4 = arith.constant 0 : index
    %c0_5 = arith.constant 0 : index
    %4 = vector.load %arg3[%c0_4, %c0_5] : memref<1x128xf32, #tpu.memory_space<vmem>>, vector<1x128xf32>
    %5 = vector.broadcast %4 : vector<1x128xf32> to vector<832x128xf32>
    %6 = arith.addf %3, %5 : vector<832x128xf32>
    %cst_6 = arith.constant 0.000000e+00 : f32
    %7 = vector.broadcast %cst_6 : f32 to vector<832x128xf32>
    %8 = arith.maximumf %6, %7 : vector<832x128xf32>
    %9 = vector.extract_strided_slice %8 {offsets = [0, 0], sizes = [208, 128], strides = [1, 1]} : vector<832x128xf32> to vector<208x128xf32>
    %10 = vector.extract_strided_slice %8 {offsets = [208, 0], sizes = [208, 128], strides = [1, 1]} : vector<832x128xf32> to vector<208x128xf32>
    %11 = arith.maximumf %9, %10 : vector<208x128xf32>
    %12 = vector.extract_strided_slice %8 {offsets = [416, 0], sizes = [208, 128], strides = [1, 1]} : vector<832x128xf32> to vector<208x128xf32>
    %13 = vector.extract_strided_slice %8 {offsets = [624, 0], sizes = [208, 128], strides = [1, 1]} : vector<832x128xf32> to vector<208x128xf32>
    %14 = arith.maximumf %12, %13 : vector<208x128xf32>
    %15 = arith.maximumf %11, %14 : vector<208x128xf32>
    %16 = arith.truncf %15 : vector<208x128xf32> to vector<208x128xbf16>
    %c0_7 = arith.constant 0 : index
    %c0_8 = arith.constant 0 : index
    %c0_9 = arith.constant 0 : index
    %17 = vector.load %arg4[%c0_7, %c0_8, %c0_9] : memref<1x208x128xbf16, #tpu.memory_space<vmem>>, vector<1x208x128xbf16>
    %18 = vector.shape_cast %17 : vector<1x208x128xbf16> to vector<208x128xbf16>
    %19 = vector.shape_cast %16 : vector<208x128xbf16> to vector<1x208x128xbf16>
    tpu.vector_store %arg4[%c0_7, %c0_8, %c0_9], %19 {strides = array<i32>} : memref<1x208x128xbf16, #tpu.memory_space<vmem>>, vector<1x208x128xbf16>,
    return
  }
  func.func @transform_0(%arg0: i32) -> (i32, i32, i32) {
    %c0_i32 = arith.constant 0 : i32
    %c0_i32_0 = arith.constant 0 : i32
    %c0_i32_1 = arith.constant 0 : i32
    return %arg0, %c0_i32, %c0_i32_0 : i32, i32, i32
  }
  func.func @transform_1(%arg0: i32) -> (i32, i32) {
    %c0_i32 = arith.constant 0 : i32
    %c0_i32_0 = arith.constant 0 : i32
    %c0_i32_1 = arith.constant 0 : i32
    return %c0_i32, %c0_i32_0 : i32, i32
  }
  func.func @transform_2(%arg0: i32) -> (i32, i32) {
    %c0_i32 = arith.constant 0 : i32
    %c0_i32_0 = arith.constant 0 : i32
    %c0_i32_1 = arith.constant 0 : i32
    return %c0_i32, %c0_i32_0 : i32, i32
  }
  func.func @transform_3(%arg0: i32) -> (i32, i32, i32) {
    %c0_i32 = arith.constant 0 : i32
    %c0_i32_0 = arith.constant 0 : i32
    %c0_i32_1 = arith.constant 0 : i32
    return %arg0, %c0_i32, %c0_i32_0 : i32, i32, i32
  }
}

module attributes {stable_mosaic.version = 11 : i64} {
  func.func @_conv_relu_pool_kernel(%arg0: i32, %arg1: memref<1x128x256xbf16, #tpu.memory_space<vmem>>, %arg2: memref<256x128xbf16, #tpu.memory_space<vmem>>, %arg3: memref<1x128xf32, #tpu.memory_space<vmem>>, %arg4: memref<1x32x128xbf16, #tpu.memory_space<vmem>>) attributes {dimension_semantics = [#tpu.dimension_semantics<parallel>], iteration_bounds = array<i64: 2>, scalar_prefetch = 0 : i64, scratch_operands = 0 : i64, tpu.core_type = #tpu.core_type<tc>, window_params = [{transform_indices = @transform_0, window_bounds = array<i64: 1, 128, 256>}, {pipeline_mode = #tpu.pipeline_mode<synchronous>, transform_indices = @transform_1, window_bounds = array<i64: 256, 128>}, {pipeline_mode = #tpu.pipeline_mode<synchronous>, transform_indices = @transform_2, window_bounds = array<i64: 1, 128>}, {transform_indices = @transform_3, window_bounds = array<i64: 1, 32, 128>}]} {
    %c0 = arith.constant 0 : index
    %c0_0 = arith.constant 0 : index
    %c0_1 = arith.constant 0 : index
    %0 = vector.load %arg1[%c0, %c0_0, %c0_1] : memref<1x128x256xbf16, #tpu.memory_space<vmem>>, vector<1x128x256xbf16>
    %1 = vector.shape_cast %0 : vector<1x128x256xbf16> to vector<128x256xbf16>
    %c0_2 = arith.constant 0 : index
    %c0_3 = arith.constant 0 : index
    %2 = vector.load %arg2[%c0_2, %c0_3] : memref<256x128xbf16, #tpu.memory_space<vmem>>, vector<256x128xbf16>
    %cst = arith.constant dense<0.000000e+00> : vector<128x128xf32>
    %3 = tpu.matmul %1, %2, %cst {dimension_numbers = #tpu.dot_dimension_numbers<[1], [0], [0], [1], [0, 0, 1, 1], [], []>} : vector<128x256xbf16>, vector<256x128xbf16>, vector<128x128xf32> -> vector<128x128xf32>
    %c0_4 = arith.constant 0 : index
    %c0_5 = arith.constant 0 : index
    %4 = vector.load %arg3[%c0_4, %c0_5] : memref<1x128xf32, #tpu.memory_space<vmem>>, vector<1x128xf32>
    %5 = vector.broadcast %4 : vector<1x128xf32> to vector<128x128xf32>
    %6 = arith.addf %3, %5 : vector<128x128xf32>
    %cst_6 = arith.constant 0.000000e+00 : f32
    %7 = vector.broadcast %cst_6 : f32 to vector<128x128xf32>
    %8 = arith.maximumf %6, %7 : vector<128x128xf32>
    %9 = vector.extract_strided_slice %8 {offsets = [0, 0], sizes = [32, 128], strides = [1, 1]} : vector<128x128xf32> to vector<32x128xf32>
    %10 = vector.extract_strided_slice %8 {offsets = [32, 0], sizes = [32, 128], strides = [1, 1]} : vector<128x128xf32> to vector<32x128xf32>
    %11 = arith.maximumf %9, %10 : vector<32x128xf32>
    %12 = vector.extract_strided_slice %8 {offsets = [64, 0], sizes = [32, 128], strides = [1, 1]} : vector<128x128xf32> to vector<32x128xf32>
    %13 = vector.extract_strided_slice %8 {offsets = [96, 0], sizes = [32, 128], strides = [1, 1]} : vector<128x128xf32> to vector<32x128xf32>
    %14 = arith.maximumf %12, %13 : vector<32x128xf32>
    %15 = arith.maximumf %11, %14 : vector<32x128xf32>
    %16 = arith.truncf %15 : vector<32x128xf32> to vector<32x128xbf16>
    %c0_7 = arith.constant 0 : index
    %c0_8 = arith.constant 0 : index
    %c0_9 = arith.constant 0 : index
    %17 = vector.load %arg4[%c0_7, %c0_8, %c0_9] : memref<1x32x128xbf16, #tpu.memory_space<vmem>>, vector<1x32x128xbf16>
    %18 = vector.shape_cast %17 : vector<1x32x128xbf16> to vector<32x128xbf16>
    %19 = vector.shape_cast %16 : vector<32x128xbf16> to vector<1x32x128xbf16>
    tpu.vector_store %arg4[%c0_7, %c0_8, %c0_9], %19 {strides = array<i32>} : memref<1x32x128xbf16, #tpu.memory_space<vmem>>, vector<1x32x128xbf16>,
    return
  }
  func.func @transform_0(%arg0: i32) -> (i32, i32, i32) {
    %c0_i32 = arith.constant 0 : i32
    %c0_i32_0 = arith.constant 0 : i32
    %c0_i32_1 = arith.constant 0 : i32
    return %arg0, %c0_i32, %c0_i32_0 : i32, i32, i32
  }
  func.func @transform_1(%arg0: i32) -> (i32, i32) {
    %c0_i32 = arith.constant 0 : i32
    %c0_i32_0 = arith.constant 0 : i32
    %c0_i32_1 = arith.constant 0 : i32
    return %c0_i32, %c0_i32_0 : i32, i32
  }
  func.func @transform_2(%arg0: i32) -> (i32, i32) {
    %c0_i32 = arith.constant 0 : i32
    %c0_i32_0 = arith.constant 0 : i32
    %c0_i32_1 = arith.constant 0 : i32
    return %c0_i32, %c0_i32_0 : i32, i32
  }
  func.func @transform_3(%arg0: i32) -> (i32, i32, i32) {
    %c0_i32 = arith.constant 0 : i32
    %c0_i32_0 = arith.constant 0 : i32
    %c0_i32_1 = arith.constant 0 : i32
    return %arg0, %c0_i32, %c0_i32_0 : i32, i32, i32
  }
}

module attributes {stable_mosaic.version = 11 : i64} {
  func.func @_mlp3_kernel(%arg0: memref<2x512xbf16, #tpu.memory_space<vmem>>, %arg1: memref<512x128xbf16, #tpu.memory_space<vmem>>, %arg2: memref<1x128xf32, #tpu.memory_space<vmem>>, %arg3: memref<128x128xbf16, #tpu.memory_space<vmem>>, %arg4: memref<1x128xf32, #tpu.memory_space<vmem>>, %arg5: memref<128x128xbf16, #tpu.memory_space<vmem>>, %arg6: memref<1x128xf32, #tpu.memory_space<vmem>>, %arg7: memref<2x128xf32, #tpu.memory_space<vmem>>) attributes {dimension_semantics = [], scalar_prefetch = 0 : i64, scratch_operands = 0 : i64, tpu.core_type = #tpu.core_type<tc>} {
    %c0 = arith.constant 0 : index
    %c0_0 = arith.constant 0 : index
    %0 = vector.load %arg0[%c0, %c0_0] : memref<2x512xbf16, #tpu.memory_space<vmem>>, vector<2x512xbf16>
    %c0_1 = arith.constant 0 : index
    %c0_2 = arith.constant 0 : index
    %1 = vector.load %arg1[%c0_1, %c0_2] : memref<512x128xbf16, #tpu.memory_space<vmem>>, vector<512x128xbf16>
    %cst = arith.constant dense<0.000000e+00> : vector<2x128xf32>
    %2 = tpu.matmul %0, %1, %cst {dimension_numbers = #tpu.dot_dimension_numbers<[1], [0], [0], [1], [0, 0, 1, 1], [], []>} : vector<2x512xbf16>, vector<512x128xbf16>, vector<2x128xf32> -> vector<2x128xf32>
    %c0_3 = arith.constant 0 : index
    %c0_4 = arith.constant 0 : index
    %3 = vector.load %arg2[%c0_3, %c0_4] : memref<1x128xf32, #tpu.memory_space<vmem>>, vector<1x128xf32>
    %4 = vector.broadcast %3 : vector<1x128xf32> to vector<2x128xf32>
    %5 = arith.addf %2, %4 : vector<2x128xf32>
    %cst_5 = arith.constant 0.000000e+00 : f32
    %6 = vector.broadcast %cst_5 : f32 to vector<2x128xf32>
    %7 = arith.maximumf %5, %6 : vector<2x128xf32>
    %8 = arith.truncf %7 : vector<2x128xf32> to vector<2x128xbf16>
    %c0_6 = arith.constant 0 : index
    %c0_7 = arith.constant 0 : index
    %9 = vector.load %arg3[%c0_6, %c0_7] : memref<128x128xbf16, #tpu.memory_space<vmem>>, vector<128x128xbf16>
    %cst_8 = arith.constant dense<0.000000e+00> : vector<2x128xf32>
    %10 = tpu.matmul %8, %9, %cst_8 {dimension_numbers = #tpu.dot_dimension_numbers<[1], [0], [0], [1], [0, 0, 1, 1], [], []>} : vector<2x128xbf16>, vector<128x128xbf16>, vector<2x128xf32> -> vector<2x128xf32>
    %c0_9 = arith.constant 0 : index
    %c0_10 = arith.constant 0 : index
    %11 = vector.load %arg4[%c0_9, %c0_10] : memref<1x128xf32, #tpu.memory_space<vmem>>, vector<1x128xf32>
    %12 = vector.broadcast %11 : vector<1x128xf32> to vector<2x128xf32>
    %13 = arith.addf %10, %12 : vector<2x128xf32>
    %cst_11 = arith.constant 0.000000e+00 : f32
    %14 = vector.broadcast %cst_11 : f32 to vector<2x128xf32>
    %15 = arith.maximumf %13, %14 : vector<2x128xf32>
    %16 = arith.truncf %15 : vector<2x128xf32> to vector<2x128xbf16>
    %c0_12 = arith.constant 0 : index
    %c0_13 = arith.constant 0 : index
    %17 = vector.load %arg5[%c0_12, %c0_13] : memref<128x128xbf16, #tpu.memory_space<vmem>>, vector<128x128xbf16>
    %cst_14 = arith.constant dense<0.000000e+00> : vector<2x128xf32>
    %18 = tpu.matmul %16, %17, %cst_14 {dimension_numbers = #tpu.dot_dimension_numbers<[1], [0], [0], [1], [0, 0, 1, 1], [], []>} : vector<2x128xbf16>, vector<128x128xbf16>, vector<2x128xf32> -> vector<2x128xf32>
    %c0_15 = arith.constant 0 : index
    %c0_16 = arith.constant 0 : index
    %19 = vector.load %arg6[%c0_15, %c0_16] : memref<1x128xf32, #tpu.memory_space<vmem>>, vector<1x128xf32>
    %20 = vector.broadcast %19 : vector<1x128xf32> to vector<2x128xf32>
    %21 = arith.addf %18, %20 : vector<2x128xf32>
    %c0_17 = arith.constant 0 : index
    %c0_18 = arith.constant 0 : index
    %22 = vector.load %arg7[%c0_17, %c0_18] : memref<2x128xf32, #tpu.memory_space<vmem>>, vector<2x128xf32>
    tpu.vector_store %arg7[%c0_17, %c0_18], %21 {strides = array<i32>} : memref<2x128xf32, #tpu.memory_space<vmem>>, vector<2x128xf32>,
    return
  }
}

</mosaic_0001>

<llo_original>
// kernel: lenet_forward.3
$region0: #{lenet_forward.3}
  #allocation0 [shape = 'u32[]', space=smem, size = 0x4, offset = 0x4, fixed_abs, tag = 'smem constant byte address 0x4 - core index']
  #allocation1 [shape = 'u32[144,128]{1,0:T(1,128)}', space=vmem, size = 0x12000, scoped, tag = 'internal scratch']
  %s0 = inlined_call_operand.vmem [shape: bf16[2,832,128], index: 0, kind: input, shape index: {}]
  %s1 = inlined_call_operand.vmem [shape: bf16[128,128], index: 1, kind: input, shape index: {}]
  %s2 = inlined_call_operand.vmem [shape: f32[1,128], index: 2, kind: input, shape index: {}]
  %s3 = inlined_call_operand.vmem [shape: bf16[2,208,128], index: 3, kind: output, shape index: {}]
  %s4 = sld [smem:[#allocation0]]
  $region45: #{lenet_forward.3} parent=0
    _
  %s6 = ssub.s32 1, %s4
  %s7 = scalar_select 0, %s6, %s4
  loop: start=0, step=1, limit=4
  $region2: #{lenet_forward.3} parent=0 // loop_pre_header
    _
  $region3: #{lenet_forward.3} parent=0 // loop_header
    %s9 = sphi 0, %s13
    %p10 = scmp.ge.s32.totalorder %s9, 4
    %s19 = sphi 0, %s21
    %s22 = sphi 0, %s19
    %s23 = sphi 0, %s22
    %s39 = sphi 0, %s23
    %s43 = sphi 0, %s43
    %s45 = sphi 0, %s43
    %s46 = sphi 0, %s45
    %s60 = sphi 0, %s46
    %s64 = sphi 0, %s64
    %s66 = sphi 0, %s64
    %s67 = sphi 0, %s66
    %s81 = sphi 0, %s67
    %s87 = sphi 0, %s89
    %s90 = sphi 0, %s87
    %s91 = sphi 0, %s90
    %s107 = sphi 0, %s91
  $region4: #{lenet_forward.3} parent=0 // loop_header_branch
    %12 = sbr.rel (%p10) target = $region8
  $region5: #{lenet_forward.3} parent=0 // loop_body
    %s14 = ssub.s32 %s9, 1
    %s15 = ssub.s32 %s9, 2
    %s16 = sadd.s32 %s9, 1
    %s17 = ssub.s32 %s9, %s16
    %p18 = scmp.eq.s32.totalorder %s17, 0
    %s20 = sadd.s32 %s19, 1
    %s21 = scalar_select %p18, %s19, %s20
    %p24 = pneg %p18
    %p25 = scmp.eq.s32.totalorder %s9, 1
    %p26 = por %p24, %p25
    %p27 = scmp.ne.s32.totalorder %s19, %s22
    %p28 = scmp.eq.s32.totalorder %s9, 0
    %p29 = por %p27, %p28
    %p30 = scmp.ne.s32.totalorder %s19, %s22
    %p31 = scmp.eq.s32.totalorder %s14, 1
    %p32 = por %p30, %p31
    %p33 = scmp.ne.s32.totalorder %s22, %s23
    %p34 = scmp.eq.s32.totalorder %s14, 0
    %p35 = por %p33, %p34
    %p36 = scmp.ne.s32.totalorder %s22, %s23
    %p37 = scmp.eq.s32.totalorder %s15, 1
    %p38 = por %p36, %p37
    %p40 = scmp.ne.s32.totalorder %s23, %s39
    %p41 = scmp.eq.s32.totalorder %s15, 0
    %p42 = por %p40, %p41
    %s44 = sadd.s32 %s43, 1
    %p47 = scmp.eq.s32.totalorder %s9, 1
    %p48 = scmp.ne.s32.totalorder %s43, %s45
    %p49 = scmp.eq.s32.totalorder %s9, 0
    %p50 = por %p48, %p49
    %p51 = scmp.ne.s32.totalorder %s43, %s45
    %p52 = scmp.eq.s32.totalorder %s14, 1
    %p53 = por %p51, %p52
    %p54 = scmp.ne.s32.totalorder %s45, %s46
    %p55 = scmp.eq.s32.totalorder %s14, 0
    %p56 = por %p54, %p55
    %p57 = scmp.ne.s32.totalorder %s45, %s46
    %p58 = scmp.eq.s32.totalorder %s15, 1
    %p59 = por %p57, %p58
    %p61 = scmp.ne.s32.totalorder %s46, %s60
    %p62 = scmp.eq.s32.totalorder %s15, 0
    %p63 = por %p61, %p62
    %s65 = sadd.s32 %s64, 1
    %p68 = scmp.eq.s32.totalorder %s9, 1
    %p69 = scmp.ne.s32.totalorder %s64, %s66
    %p70 = scmp.eq.s32.totalorder %s9, 0
    %p71 = por %p69, %p70
    %p72 = scmp.ne.s32.totalorder %s64, %s66
    %p73 = scmp.eq.s32.totalorder %s14, 1
    %p74 = por %p72, %p73
    %p75 = scmp.ne.s32.totalorder %s66, %s67
    %p76 = scmp.eq.s32.totalorder %s14, 0
    %p77 = por %p75, %p76
    %p78 = scmp.ne.s32.totalorder %s66, %s67
    %p79 = scmp.eq.s32.totalorder %s15, 1
    %p80 = por %p78, %p79
    %p82 = scmp.ne.s32.totalorder %s67, %s81
    %p83 = scmp.eq.s32.totalorder %s15, 0
    %p84 = por %p82, %p83
    %s85 = ssub.s32 %s9, %s16
    %p86 = scmp.eq.s32.totalorder %s85, 0
    %s88 = sadd.s32 %s87, 1
    %s89 = scalar_select %p86, %s87, %s88
    %p92 = pneg %p86
    %p93 = scmp.eq.s32.totalorder %s9, 1
    %p94 = por %p92, %p93
    %p95 = scmp.ne.s32.totalorder %s87, %s90
    %p96 = scmp.eq.s32.totalorder %s9, 0
    %p97 = por %p95, %p96
    %p98 = scmp.ne.s32.totalorder %s87, %s90
    %p99 = scmp.eq.s32.totalorder %s14, 1
    %p100 = por %p98, %p99
    %p101 = scmp.ne.s32.totalorder %s90, %s91
    %p102 = scmp.eq.s32.totalorder %s14, 0
    %p103 = por %p101, %p102
    %p104 = scmp.ne.s32.totalorder %s90, %s91
    %p105 = scmp.eq.s32.totalorder %s15, 1
    %p106 = por %p104, %p105
    %p108 = scmp.ne.s32.totalorder %s91, %s107
    %p109 = scmp.eq.s32.totalorder %s15, 0
    %p110 = por %p108, %p109
    %p111 = scmp.le.s32.totalorder 1, %s9
    %p112 = scmp.lt.s32.totalorder %s9, 3
    %p113 = pnand %p111, %p112
    %p114 = pneg %p113
    // Predicated region
    $region9: #{lenet_forward.3} parent=5 // pred_check
      _
    $region10: #{lenet_forward.3} parent=5 // pred_check_branch
      %116 = sbr.rel (%p113) target = $region12
    $region11: #{lenet_forward.3} parent=5 // pred_region
      %s117 = ssub.s32 %s9, 1
      // Predicated region
      $region13: #{lenet_forward.3} parent=11 // pred_check
        %p118 = pneg %p56
      $region14: #{lenet_forward.3} parent=11 // pred_check_branch
        %120 = sbr.rel (%p118) target = $region16
      $region15: #{lenet_forward.3} parent=11 // pred_region
        _
      $region16: #{lenet_forward.3} parent=11 // pred_fallthru
        _
      // Predicated region
      $region17: #{lenet_forward.3} parent=11 // pred_check
        %p121 = pneg %p77
      $region18: #{lenet_forward.3} parent=11 // pred_check_branch
        %123 = sbr.rel (%p121) target = $region20
      $region19: #{lenet_forward.3} parent=11 // pred_region
        _
      $region20: #{lenet_forward.3} parent=11 // pred_fallthru
        _
    $region12: #{lenet_forward.3} parent=5 // pred_fallthru
      _
    %p124 = scmp.lt.s32.totalorder %s9, 2
    // Predicated region
    $region21: #{lenet_forward.3} parent=5 // pred_check
      %p125 = pneg %p124
    $region22: #{lenet_forward.3} parent=5 // pred_check_branch
      %127 = sbr.rel (%p125) target = $region24
    $region23: #{lenet_forward.3} parent=5 // pred_region
      // Predicated region
      $region25: #{lenet_forward.3} parent=23 // pred_check
        %p128 = pneg %p29
      $region26: #{lenet_forward.3} parent=23 // pred_check_branch
        %130 = sbr.rel (%p128) target = $region28
      $region27: #{lenet_forward.3} parent=23 // pred_region
        %p131 = scmp.lt.s32.totalorder %s9, 1
        %s132 = scalar_select %p131, %s9, 1
        %s133 = smul.addr %s132, 104
        %s134 = smul.addr %s133, 4
        %s135 = scalar_lea.vmem %s0, %s134
      $region28: #{lenet_forward.3} parent=23 // pred_fallthru
        _
    $region24: #{lenet_forward.3} parent=5 // pred_fallthru
      _
    %p136 = scmp.le.s32.totalorder 1, %s9
    %p137 = scmp.lt.s32.totalorder %s9, 3
    %p138 = pnand %p136, %p137
    %p139 = pneg %p138
    // Predicated region
    $region29: #{lenet_forward.3} parent=5 // pred_check
      _
    $region30: #{lenet_forward.3} parent=5 // pred_check_branch
      %141 = sbr.rel (%p138) target = $region32
    $region31: #{lenet_forward.3} parent=5 // pred_region
      %s142 = ssub.s32 %s9, 1
      %p143 = scmp.lt.s32.totalorder %s14, 1
      %s144 = scalar_select %p143, %s14, 1
      %s145 = smul.addr %s144, 104
      %s146 = smul.addr %s145, 4
      %s147 = scalar_lea.vmem %s0, %s146
      %p148 = pneg %p35
      %p149 = pneg %p32
      %p150 = pneg %p56
      %p151 = pneg %p53
      %p152 = pneg %p77
      %p153 = pneg %p74
      %p154 = pneg %p103
      %p155 = pneg %p100
      %p156 = scmp.lt.s32.totalorder %s14, 1
      %s157 = scalar_select %p156, %s14, 1
      %s158 = smul.addr %s157, 26
      %s159 = smul.addr %s158, 4
      %s160 = scalar_lea.vmem %s3, %s159
      %p161 = scmp.lt.s32.totalorder %s14, 1
      %s162 = scalar_select %p161, %s14, 1
      %s163 = smul.addr %s162, 104
      %s164 = smul.addr %s163, 4
      %s165 = scalar_lea.vmem %s0, %s164
      %p166 = scmp.lt.s32.totalorder %s14, 1
      %s167 = scalar_select %p166, %s14, 1
      %s168 = smul.addr %s167, 26
      %s169 = smul.addr %s168, 4
      %s170 = scalar_lea.vmem %s3, %s169
      %v172 = vld [vmem:[%s165] sm:$0xf]
      %v173 = vld [vmem:[%s165 + $0x4] sm:$0xf]
      %v174 = vld [vmem:[%s165 + $0x8] sm:$0xf]
      %v175 = vld [vmem:[%s165 + $0xc] sm:$0xf]
      %v176 = vld [vmem:[%s165 + $0x10] sm:$0xf]
      %v177 = vld [vmem:[%s165 + $0x14] sm:$0xf]
      %v178 = vld [vmem:[%s165 + $0x18] sm:$0xf]
      %v179 = vld [vmem:[%s165 + $0x1c] sm:$0xf]
      %v180 = vld [vmem:[%s165 + $0x20] sm:$0xf]
      %v181 = vld [vmem:[%s165 + $0x24] sm:$0xf]
      %v182 = vld [vmem:[%s165 + $0x28] sm:$0xf]
      %v183 = vld [vmem:[%s165 + $0x2c] sm:$0xf]
      %v184 = vld [vmem:[%s165 + $0x30] sm:$0xf]
      %v185 = vld [vmem:[%s165 + $0x34] sm:$0xf]
      %v186 = vld [vmem:[%s165 + $0x38] sm:$0xf]
      %v187 = vld [vmem:[%s165 + $0x3c] sm:$0xf]
      %v188 = vld [vmem:[%s165 + $0x40] sm:$0xf]
      %v189 = vld [vmem:[%s165 + $0x44] sm:$0xf]
      %v190 = vld [vmem:[%s165 + $0x48] sm:$0xf]
      %v191 = vld [vmem:[%s165 + $0x4c] sm:$0xf]
      %v192 = vld [vmem:[%s165 + $0x50] sm:$0xf]
      %v193 = vld [vmem:[%s165 + $0x54] sm:$0xf]
      %v194 = vld [vmem:[%s165 + $0x58] sm:$0xf]
      %v195 = vld [vmem:[%s165 + $0x5c] sm:$0xf]
      %v196 = vld [vmem:[%s165 + $0x60] sm:$0xf]
      %v197 = vld [vmem:[%s165 + $0x64] sm:$0xf]
      %v198 = vld [vmem:[%s165 + $0x68] sm:$0xf]
      %v199 = vld [vmem:[%s165 + $0x6c] sm:$0xf]
      %v200 = vld [vmem:[%s165 + $0x70] sm:$0xf]
      %v201 = vld [vmem:[%s165 + $0x74] sm:$0xf]
      %v202 = vld [vmem:[%s165 + $0x78] sm:$0xf]
      %v203 = vld [vmem:[%s165 + $0x7c] sm:$0xf]
      %v204 = vld [vmem:[%s165 + $0x80] sm:$0xf]
      %v205 = vld [vmem:[%s165 + $0x84] sm:$0xf]
      %v206 = vld [vmem:[%s165 + $0x88] sm:$0xf]
      %v207 = vld [vmem:[%s165 + $0x8c] sm:$0xf]
      %v208 = vld [vmem:[%s165 + $0x90] sm:$0xf]
      %v209 = vld [vmem:[%s165 + $0x94] sm:$0xf]
      %v210 = vld [vmem:[%s165 + $0x98] sm:$0xf]
      %v211 = vld [vmem:[%s165 + $0x9c] sm:$0xf]
      %v212 = vld [vmem:[%s165 + $0xa0] sm:$0xf]
      %v213 = vld [vmem:[%s165 + $0xa4] sm:$0xf]
      %v214 = vld [vmem:[%s165 + $0xa8] sm:$0xf]
      %v215 = vld [vmem:[%s165 + $0xac] sm:$0xf]
      %v216 = vld [vmem:[%s165 + $0xb0] sm:$0xf]
      %v217 = vld [vmem:[%s165 + $0xb4] sm:$0xf]
      %v218 = vld [vmem:[%s165 + $0xb8] sm:$0xf]
      %v219 = vld [vmem:[%s165 + $0xbc] sm:$0xf]
      %v220 = vld [vmem:[%s165 + $0xc0] sm:$0xf]
      %v221 = vld [vmem:[%s165 + $0xc4] sm:$0xf]
      %v222 = vld [vmem:[%s165 + $0xc8] sm:$0xf]
      %v223 = vld [vmem:[%s165 + $0xcc] sm:$0xf]
      %v224 = vld [vmem:[%s165 + $0xd0] sm:$0xf]
      %v225 = vld [vmem:[%s165 + $0xd4] sm:$0xf]
      %v226 = vld [vmem:[%s165 + $0xd8] sm:$0xf]
      %v227 = vld [vmem:[%s165 + $0xdc] sm:$0xf]
      %v228 = vld [vmem:[%s165 + $0xe0] sm:$0xf]
      %v229 = vld [vmem:[%s165 + $0xe4] sm:$0xf]
      %v230 = vld [vmem:[%s165 + $0xe8] sm:$0xf]
      %v231 = vld [vmem:[%s165 + $0xec] sm:$0xf]
      %v232 = vld [vmem:[%s165 + $0xf0] sm:$0xf]
      %v233 = vld [vmem:[%s165 + $0xf4] sm:$0xf]
      %v234 = vld [vmem:[%s165 + $0xf8] sm:$0xf]
      %v235 = vld [vmem:[%s165 + $0xfc] sm:$0xf]
      %v236 = vld [vmem:[%s165 + $0x100] sm:$0xf]
      %v237 = vld [vmem:[%s165 + $0x104] sm:$0xf]
      %v238 = vld [vmem:[%s165 + $0x108] sm:$0xf]
      %v239 = vld [vmem:[%s165 + $0x10c] sm:$0xf]
      %v240 = vld [vmem:[%s165 + $0x110] sm:$0xf]
      %v241 = vld [vmem:[%s165 + $0x114] sm:$0xf]
      %v242 = vld [vmem:[%s165 + $0x118] sm:$0xf]
      %v243 = vld [vmem:[%s165 + $0x11c] sm:$0xf]
      %v244 = vld [vmem:[%s165 + $0x120] sm:$0xf]
      %v245 = vld [vmem:[%s165 + $0x124] sm:$0xf]
      %v246 = vld [vmem:[%s165 + $0x128] sm:$0xf]
      %v247 = vld [vmem:[%s165 + $0x12c] sm:$0xf]
      %v248 = vld [vmem:[%s165 + $0x130] sm:$0xf]
      %v249 = vld [vmem:[%s165 + $0x134] sm:$0xf]
      %v250 = vld [vmem:[%s165 + $0x138] sm:$0xf]
      %v251 = vld [vmem:[%s165 + $0x13c] sm:$0xf]
      %v252 = vld [vmem:[%s165 + $0x140] sm:$0xf]
      %v253 = vld [vmem:[%s165 + $0x144] sm:$0xf]
      %v254 = vld [vmem:[%s165 + $0x148] sm:$0xf]
      %v255 = vld [vmem:[%s165 + $0x14c] sm:$0xf]
      %v256 = vld [vmem:[%s165 + $0x150] sm:$0xf]
      %v257 = vld [vmem:[%s165 + $0x154] sm:$0xf]
      %v258 = vld [vmem:[%s165 + $0x158] sm:$0xf]
      %v259 = vld [vmem:[%s165 + $0x15c] sm:$0xf]
      %v260 = vld [vmem:[%s165 + $0x160] sm:$0xf]
      %v261 = vld [vmem:[%s165 + $0x164] sm:$0xf]
      %v262 = vld [vmem:[%s165 + $0x168] sm:$0xf]
      %v263 = vld [vmem:[%s165 + $0x16c] sm:$0xf]
      %v264 = vld [vmem:[%s165 + $0x170] sm:$0xf]
      %v265 = vld [vmem:[%s165 + $0x174] sm:$0xf]
      %v266 = vld [vmem:[%s165 + $0x178] sm:$0xf]
      %v267 = vld [vmem:[%s165 + $0x17c] sm:$0xf]
      %v268 = vld [vmem:[%s165 + $0x180] sm:$0xf]
      %v269 = vld [vmem:[%s165 + $0x184] sm:$0xf]
      %v270 = vld [vmem:[%s165 + $0x188] sm:$0xf]
      %v271 = vld [vmem:[%s165 + $0x18c] sm:$0xf]
      %v272 = vld [vmem:[%s165 + $0x190] sm:$0xf]
      %v273 = vld [vmem:[%s165 + $0x194] sm:$0xf]
      %v274 = vld [vmem:[%s165 + $0x198] sm:$0xf]
      %v275 = vld [vmem:[%s165 + $0x19c] sm:$0xf]
      %v276 = vld [vmem:[%s1] sm:$0xf]
      %v277 = vld [vmem:[%s1 + $0x4] sm:$0xf]
      %v278 = vld [vmem:[%s1 + $0x8] sm:$0xf]
      %v279 = vld [vmem:[%s1 + $0xc] sm:$0xf]
      %v280 = vld [vmem:[%s1 + $0x10] sm:$0xf]
      %v281 = vld [vmem:[%s1 + $0x14] sm:$0xf]
      %v282 = vld [vmem:[%s1 + $0x18] sm:$0xf]
      %v283 = vld [vmem:[%s1 + $0x1c] sm:$0xf]
      %v284 = vld [vmem:[%s1 + $0x20] sm:$0xf]
      %v285 = vld [vmem:[%s1 + $0x24] sm:$0xf]
      %v286 = vld [vmem:[%s1 + $0x28] sm:$0xf]
      %v287 = vld [vmem:[%s1 + $0x2c] sm:$0xf]
      %v288 = vld [vmem:[%s1 + $0x30] sm:$0xf]
      %v289 = vld [vmem:[%s1 + $0x34] sm:$0xf]
      %v290 = vld [vmem:[%s1 + $0x38] sm:$0xf]
      %v291 = vld [vmem:[%s1 + $0x3c] sm:$0xf]
      %v292 = vld [vmem:[%s2] sm:$0x1]
      %v294 = vlaneseq
      %v295 = vshrl.u32 %v294, 7
      %v296 = vsub.s32 0, %v295
      %v297 = vrot.slane %v292, %v296
      %v403 = vunpack.c.l.b16 %v172
      %v404 = vunpack.c.l.b16 %v173
      %v405 = vunpack.c.l.b16 %v174
      %v406 = vunpack.c.l.b16 %v175
      %v407 = vunpack.c.l.b16 %v176
      %v408 = vunpack.c.l.b16 %v177
      %v409 = vunpack.c.l.b16 %v178
      %v410 = vunpack.c.l.b16 %v179
      %v411 = vunpack.c.l.b16 %v180
      %v412 = vunpack.c.l.b16 %v181
      %v413 = vunpack.c.l.b16 %v182
      %v414 = vunpack.c.l.b16 %v183
      %v415 = vunpack.c.l.b16 %v184
      %v416 = vunpack.c.l.b16 %v185
      %v417 = vunpack.c.l.b16 %v186
      %v418 = vunpack.c.l.b16 %v187
      %v419 = vunpack.c.l.b16 %v188
      %v420 = vunpack.c.l.b16 %v189
      %v421 = vunpack.c.l.b16 %v190
      %v422 = vunpack.c.l.b16 %v191
      %v423 = vunpack.c.l.b16 %v192
      %v424 = vunpack.c.l.b16 %v193
      %v425 = vunpack.c.l.b16 %v194
      %v426 = vunpack.c.l.b16 %v195
      %v427 = vunpack.c.l.b16 %v196
      %v428 = vunpack.c.l.b16 %v197
      %v429 = vunpack.c.l.b16 %v198
      %v430 = vunpack.c.l.b16 %v199
      %v431 = vunpack.c.l.b16 %v200
      %v432 = vunpack.c.l.b16 %v201
      %v433 = vunpack.c.l.b16 %v202
      %v434 = vunpack.c.l.b16 %v203
      %v435 = vunpack.c.l.b16 %v204
      %v436 = vunpack.c.l.b16 %v205
      %v437 = vunpack.c.l.b16 %v206
      %v438 = vunpack.c.l.b16 %v207
      %v439 = vunpack.c.l.b16 %v208
      %v440 = vunpack.c.l.b16 %v209
      %v441 = vunpack.c.l.b16 %v210
      %v442 = vunpack.c.l.b16 %v211
      %v443 = vunpack.c.l.b16 %v212
      %v444 = vunpack.c.l.b16 %v213
      %v445 = vunpack.c.l.b16 %v214
      %v446 = vunpack.c.l.b16 %v215
      %v447 = vunpack.c.l.b16 %v216
      %v448 = vunpack.c.l.b16 %v217
      %v449 = vunpack.c.l.b16 %v218
      %v450 = vunpack.c.l.b16 %v219
      %v451 = vunpack.c.l.b16 %v220
      %v452 = vunpack.c.l.b16 %v221
      %v453 = vunpack.c.l.b16 %v222
      %v454 = vunpack.c.l.b16 %v223
      %v455 = vunpack.c.l.b16 %v224
      %v456 = vunpack.c.l.b16 %v225
      %v457 = vunpack.c.l.b16 %v226
      %v458 = vunpack.c.l.b16 %v227
      %v459 = vunpack.c.l.b16 %v228
      %v460 = vunpack.c.l.b16 %v229
      %v461 = vunpack.c.l.b16 %v230
      %v462 = vunpack.c.l.b16 %v231
      %v463 = vunpack.c.l.b16 %v232
      %v464 = vunpack.c.l.b16 %v233
      %v465 = vunpack.c.l.b16 %v234
      %v466 = vunpack.c.l.b16 %v235
      %v467 = vunpack.c.l.b16 %v236
      %v468 = vunpack.c.l.b16 %v237
      %v469 = vunpack.c.l.b16 %v238
      %v470 = vunpack.c.l.b16 %v239
      %v471 = vunpack.c.l.b16 %v240
      %v472 = vunpack.c.l.b16 %v241
      %v473 = vunpack.c.l.b16 %v242
      %v474 = vunpack.c.l.b16 %v243
      %v475 = vunpack.c.l.b16 %v244
      %v476 = vunpack.c.l.b16 %v245
      %v477 = vunpack.c.l.b16 %v246
      %v478 = vunpack.c.l.b16 %v247
      %v479 = vunpack.c.l.b16 %v248
      %v480 = vunpack.c.l.b16 %v249
      %v481 = vunpack.c.l.b16 %v250
      %v482 = vunpack.c.l.b16 %v251
      %v483 = vunpack.c.l.b16 %v252
      %v484 = vunpack.c.l.b16 %v253
      %v485 = vunpack.c.l.b16 %v254
      %v486 = vunpack.c.l.b16 %v255
      %v487 = vunpack.c.l.b16 %v256
      %v488 = vunpack.c.l.b16 %v257
      %v489 = vunpack.c.l.b16 %v258
      %v490 = vunpack.c.l.b16 %v259
      %v491 = vunpack.c.l.b16 %v260
      %v492 = vunpack.c.l.b16 %v261
      %v493 = vunpack.c.l.b16 %v262
      %v494 = vunpack.c.l.b16 %v263
      %v495 = vunpack.c.l.b16 %v264
      %v496 = vunpack.c.l.b16 %v265
      %v497 = vunpack.c.l.b16 %v266
      %v498 = vunpack.c.l.b16 %v267
      %v499 = vunpack.c.l.b16 %v268
      %v500 = vunpack.c.l.b16 %v269
      %v501 = vunpack.c.l.b16 %v270
      %v502 = vunpack.c.l.b16 %v271
      %v503 = vunpack.c.l.b16 %v272
      %v504 = vunpack.c.l.b16 %v273
      %v505 = vunpack.c.l.b16 %v274
      %v506 = vunpack.c.l.b16 %v275
      %v507 = vpack.c.b16 %v404, %v403
      %v508 = vpack.c.b16 %v406, %v405
      %v509 = vpack.c.b16 %v408, %v407
      %v510 = vpack.c.b16 %v410, %v409
      %v511 = vpack.c.b16 %v412, %v411
      %v512 = vpack.c.b16 %v414, %v413
      %v513 = vpack.c.b16 %v416, %v415
      %v514 = vpack.c.b16 %v418, %v417
      %v515 = vpack.c.b16 %v420, %v419
      %v516 = vpack.c.b16 %v422, %v421
      %v517 = vpack.c.b16 %v424, %v423
      %v518 = vpack.c.b16 %v426, %v425
      %v519 = vpack.c.b16 %v428, %v427
      %v520 = vpack.c.b16 %v430, %v429
      %v521 = vpack.c.b16 %v432, %v431
      %v522 = vpack.c.b16 %v434, %v433
      %v523 = vpack.c.b16 %v436, %v435
      %v524 = vpack.c.b16 %v438, %v437
      %v525 = vpack.c.b16 %v440, %v439
      %v526 = vpack.c.b16 %v442, %v441
      %v527 = vpack.c.b16 %v444, %v443
      %v528 = vpack.c.b16 %v446, %v445
      %v529 = vpack.c.b16 %v448, %v447
      %v530 = vpack.c.b16 %v450, %v449
      %v531 = vpack.c.b16 %v452, %v451
      %v532 = vpack.c.b16 %v454, %v453
      %v533 = vpack.c.b16 %v456, %v455
      %v534 = vpack.c.b16 %v458, %v457
      %v535 = vpack.c.b16 %v460, %v459
      %v536 = vpack.c.b16 %v462, %v461
      %v537 = vpack.c.b16 %v464, %v463
      %v538 = vpack.c.b16 %v466, %v465
      %v539 = vpack.c.b16 %v468, %v467
      %v540 = vpack.c.b16 %v470, %v469
      %v541 = vpack.c.b16 %v472, %v471
      %v542 = vpack.c.b16 %v474, %v473
      %v543 = vpack.c.b16 %v476, %v475
      %v544 = vpack.c.b16 %v478, %v477
      %v545 = vpack.c.b16 %v480, %v479
      %v546 = vpack.c.b16 %v482, %v481
      %v547 = vpack.c.b16 %v484, %v483
      %v548 = vpack.c.b16 %v486, %v485
      %v549 = vpack.c.b16 %v488, %v487
      %v550 = vpack.c.b16 %v490, %v489
      %v551 = vpack.c.b16 %v492, %v491
      %v552 = vpack.c.b16 %v494, %v493
      %v553 = vpack.c.b16 %v496, %v495
      %v554 = vpack.c.b16 %v498, %v497
      %v555 = vpack.c.b16 %v500, %v499
      %v556 = vpack.c.b16 %v502, %v501
      %v557 = vpack.c.b16 %v504, %v503
      %v558 = vpack.c.b16 %v506, %v505
      %v627 = vunpack.c.l.b16 %v276
      %v628 = vunpack.c.l.b16 %v277
      %v629 = vunpack.c.l.b16 %v278
      %v630 = vunpack.c.l.b16 %v279
      %v631 = vunpack.c.l.b16 %v280
      %v632 = vunpack.c.l.b16 %v281
      %v633 = vunpack.c.l.b16 %v282
      %v634 = vunpack.c.l.b16 %v283
      %v635 = vunpack.c.l.b16 %v284
      %v636 = vunpack.c.l.b16 %v285
      %v637 = vunpack.c.l.b16 %v286
      %v638 = vunpack.c.l.b16 %v287
      %v639 = vunpack.c.l.b16 %v288
      %v640 = vunpack.c.l.b16 %v289
      %v641 = vunpack.c.l.b16 %v290
      %v642 = vunpack.c.l.b16 %v291
      %v643 = vpack.c.b16 %v628, %v627
      %v644 = vpack.c.b16 %v630, %v629
      %v645 = vpack.c.b16 %v632, %v631
      %v646 = vpack.c.b16 %v634, %v633
      %v647 = vpack.c.b16 %v636, %v635
      %v648 = vpack.c.b16 %v638, %v637
      %v649 = vpack.c.b16 %v640, %v639
      %v650 = vpack.c.b16 %v642, %v641
      %659 = vmatprep.subr.bf16.mxu0 0
      %660 = vmatpush1.bf16.msra.mxu0 %v643
      %661 = vmatprep.subr.bf16.mxu0 0
      %662 = vmatpush1.bf16.msra.mxu0 %v644
      %663 = vmatprep.subr.bf16.mxu0 0
      %664 = vmatpush1.bf16.msra.mxu0 %v645
      %665 = vmatprep.subr.bf16.mxu0 0
      %666 = vmatpush1.bf16.msra.mxu0 %v646
      %667 = vmatprep.subr.bf16.mxu0 0
      %668 = vmatpush1.bf16.msra.mxu0 %v647
      %669 = vmatprep.subr.bf16.mxu0 0
      %670 = vmatpush1.bf16.msra.mxu0 %v648
      %671 = vmatprep.subr.bf16.mxu0 0
      %672 = vmatpush1.bf16.msra.mxu0 %v649
      %673 = vmatprep.subr.bf16.mxu0 0
      %674 = vmatpush1.bf16.msra.mxu0 %v650
      %675 = vmatprep.subr.bf16.mxu0 0
      %676 = vmatpush1.bf16.msra.mxu0 0
      %677 = vmatprep.subr.bf16.mxu0 0
      %678 = vmatpush1.bf16.msra.mxu0 0
      %679 = vmatprep.subr.bf16.mxu0 0
      %680 = vmatpush1.bf16.msra.mxu0 0
      %681 = vmatprep.subr.bf16.mxu0 0
      %682 = vmatpush1.bf16.msra.mxu0 0
      %683 = vmatprep.subr.bf16.mxu0 0
      %684 = vmatpush1.bf16.msra.mxu0 0
      %685 = vmatprep.subr.bf16.mxu0 0
      %686 = vmatpush1.bf16.msra.mxu0 0
      %687 = vmatprep.subr.bf16.mxu0 0
      %688 = vmatpush1.bf16.msra.mxu0 0
      %689 = vmatprep.subr.bf16.mxu0 0
      %690 = vmatpush1.bf16.msra.mxu0 0
      %691 = vmatprep.mubr.bf16.mxu0 0
      %692 = vmatmul.mubr.bf16.gmra.mrb[0].mxu0 %v507
      %v693 = vpop.f32.mrb[0].mxu0
      %v694 = vadd.f32 %v297, %v693
      %v695 = vpop.f32.mrb[0].mxu0
      %v696 = vpop.f32.mrb[0].mxu0
      %v697 = vadd.f32 %v297, %v696
      %v698 = vpop.f32.mrb[0].mxu0
      %699 = vmatprep.mubr.bf16.mxu0 0
      %700 = vmatmul.mubr.bf16.gmra.mrb[0].mxu0 %v508
      %v701 = vpop.f32.mrb[0].mxu0
      %v702 = vadd.f32 %v297, %v701
      %v703 = vpop.f32.mrb[0].mxu0
      %v704 = vpop.f32.mrb[0].mxu0
      %v705 = vadd.f32 %v297, %v704
      %v706 = vpop.f32.mrb[0].mxu0
      %707 = vmatprep.mubr.bf16.mxu0 0
      %708 = vmatmul.mubr.bf16.gmra.mrb[0].mxu0 %v509
      %v709 = vpop.f32.mrb[0].mxu0
      %v710 = vadd.f32 %v297, %v709
      %v711 = vpop.f32.mrb[0].mxu0
      %v712 = vpop.f32.mrb[0].mxu0
      %v713 = vadd.f32 %v297, %v712
      %v714 = vpop.f32.mrb[0].mxu0
      %715 = vmatprep.mubr.bf16.mxu0 0
      %716 = vmatmul.mubr.bf16.gmra.mrb[0].mxu0 %v510
      %v717 = vpop.f32.mrb[0].mxu0
      %v718 = vadd.f32 %v297, %v717
      %v719 = vpop.f32.mrb[0].mxu0
      %v720 = vpop.f32.mrb[0].mxu0
      %v721 = vadd.f32 %v297, %v720
      %v722 = vpop.f32.mrb[0].mxu0
      %723 = vmatprep.mubr.bf16.mxu0 0
      %724 = vmatmul.mubr.bf16.gmra.mrb[0].mxu0 %v511
      %v725 = vpop.f32.mrb[0].mxu0
      %v726 = vadd.f32 %v297, %v725
      %v727 = vpop.f32.mrb[0].mxu0
      %v728 = vpop.f32.mrb[0].mxu0
      %v729 = vadd.f32 %v297, %v728
      %v730 = vpop.f32.mrb[0].mxu0
      %731 = vmatprep.mubr.bf16.mxu0 0
      %732 = vmatmul.mubr.bf16.gmra.mrb[0].mxu0 %v512
      %v733 = vpop.f32.mrb[0].mxu0
      %v734 = vadd.f32 %v297, %v733
      %v735 = vpop.f32.mrb[0].mxu0
      %v736 = vpop.f32.mrb[0].mxu0
      %v737 = vadd.f32 %v297, %v736
      %v738 = vpop.f32.mrb[0].mxu0
      %739 = vmatprep.mubr.bf16.mxu0 0
      %740 = vmatmul.mubr.bf16.gmra.mrb[0].mxu0 %v513
      %v741 = vpop.f32.mrb[0].mxu0
      %v742 = vadd.f32 %v297, %v741
      %v743 = vpop.f32.mrb[0].mxu0
      %v744 = vpop.f32.mrb[0].mxu0
      %v745 = vadd.f32 %v297, %v744
      %v746 = vpop.f32.mrb[0].mxu0
      %747 = vmatprep.mubr.bf16.mxu0 0
      %748 = vmatmul.mubr.bf16.gmra.mrb[0].mxu0 %v514
      %v749 = vpop.f32.mrb[0].mxu0
      %v750 = vadd.f32 %v297, %v749
      %v751 = vpop.f32.mrb[0].mxu0
      %v752 = vpop.f32.mrb[0].mxu0
      %v753 = vadd.f32 %v297, %v752
      %v754 = vpop.f32.mrb[0].mxu0
      %755 = vmatprep.mubr.bf16.mxu0 0
      %756 = vmatmul.mubr.bf16.gmra.mrb[0].mxu0 %v515
      %v757 = vpop.f32.mrb[0].mxu0
      %v758 = vadd.f32 %v297, %v757
      %v759 = vpop.f32.mrb[0].mxu0
      %v760 = vpop.f32.mrb[0].mxu0
      %v761 = vadd.f32 %v297, %v760
      %v762 = vpop.f32.mrb[0].mxu0
      %763 = vmatprep.mubr.bf16.mxu0 0
      %764 = vmatmul.mubr.bf16.gmra.mrb[0].mxu0 %v516
      %v765 = vpop.f32.mrb[0].mxu0
      %v766 = vadd.f32 %v297, %v765
      %v767 = vpop.f32.mrb[0].mxu0
      %v768 = vpop.f32.mrb[0].mxu0
      %v769 = vadd.f32 %v297, %v768
      %v770 = vpop.f32.mrb[0].mxu0
      %771 = vmatprep.mubr.bf16.mxu0 0
      %772 = vmatmul.mubr.bf16.gmra.mrb[0].mxu0 %v517
      %v773 = vpop.f32.mrb[0].mxu0
      %v774 = vadd.f32 %v297, %v773
      %v775 = vpop.f32.mrb[0].mxu0
      %v776 = vpop.f32.mrb[0].mxu0
      %v777 = vadd.f32 %v297, %v776
      %v778 = vpop.f32.mrb[0].mxu0
      %779 = vmatprep.mubr.bf16.mxu0 0
      %780 = vmatmul.mubr.bf16.gmra.mrb[0].mxu0 %v518
      %v781 = vpop.f32.mrb[0].mxu0
      %v782 = vadd.f32 %v297, %v781
      %v783 = vpop.f32.mrb[0].mxu0
      %v784 = vpop.f32.mrb[0].mxu0
      %v785 = vadd.f32 %v297, %v784
      %v786 = vpop.f32.mrb[0].mxu0
      %787 = vmatprep.mubr.bf16.mxu0 0
      %788 = vmatmul.mubr.bf16.gmra.mrb[0].mxu0 %v519
      %v789 = vpop.f32.mrb[0].mxu0
      %v790 = vadd.f32 %v297, %v789
      %v791 = vpop.f32.mrb[0].mxu0
      %v792 = vpop.f32.mrb[0].mxu0
      %v793 = vadd.f32 %v297, %v792
      %v794 = vpop.f32.mrb[0].mxu0
      %795 = vmatprep.mubr.bf16.mxu0 0
      %796 = vmatmul.mubr.bf16.gmra.mrb[0].mxu0 %v520
      %v797 = vpop.f32.mrb[0].mxu0
      %v798 = vadd.f32 %v297, %v797
      %v799 = vpop.f32.mrb[0].mxu0
      %v800 = vpop.f32.mrb[0].mxu0
      %v801 = vadd.f32 %v297, %v800
      %v802 = vpop.f32.mrb[0].mxu0
      %803 = vmatprep.mubr.bf16.mxu0 0
      %804 = vmatmul.mubr.bf16.gmra.mrb[0].mxu0 %v521
      %v805 = vpop.f32.mrb[0].mxu0
      %v806 = vadd.f32 %v297, %v805
      %v807 = vpop.f32.mrb[0].mxu0
      %v808 = vpop.f32.mrb[0].mxu0
      %v809 = vadd.f32 %v297, %v808
      %v810 = vpop.f32.mrb[0].mxu0
      %811 = vmatprep.mubr.bf16.mxu0 0
      %812 = vmatmul.mubr.bf16.gmra.mrb[0].mxu0 %v522
      %v813 = vpop.f32.mrb[0].mxu0
      %v814 = vadd.f32 %v297, %v813
      %v815 = vpop.f32.mrb[0].mxu0
      %v816 = vpop.f32.mrb[0].mxu0
      %v817 = vadd.f32 %v297, %v816
      %v818 = vpop.f32.mrb[0].mxu0
      %819 = vmatprep.mubr.bf16.mxu0 0
      %820 = vmatmul.mubr.bf16.gmra.mrb[0].mxu0 %v523
      %v821 = vpop.f32.mrb[0].mxu0
      %v822 = vadd.f32 %v297, %v821
      %v823 = vpop.f32.mrb[0].mxu0
      %v824 = vpop.f32.mrb[0].mxu0
      %v825 = vadd.f32 %v297, %v824
      %v826 = vpop.f32.mrb[0].mxu0
      %827 = vmatprep.mubr.bf16.mxu0 0
      %828 = vmatmul.mubr.bf16.gmra.mrb[0].mxu0 %v524
      %v829 = vpop.f32.mrb[0].mxu0
      %v830 = vadd.f32 %v297, %v829
      %v831 = vpop.f32.mrb[0].mxu0
      %v832 = vpop.f32.mrb[0].mxu0
      %v833 = vadd.f32 %v297, %v832
      %v834 = vpop.f32.mrb[0].mxu0
      %835 = vmatprep.mubr.bf16.mxu0 0
      %836 = vmatmul.mubr.bf16.gmra.mrb[0].mxu0 %v525
      %v837 = vpop.f32.mrb[0].mxu0
      %v838 = vadd.f32 %v297, %v837
      %v839 = vpop.f32.mrb[0].mxu0
      %v840 = vpop.f32.mrb[0].mxu0
      %v841 = vadd.f32 %v297, %v840
      %v842 = vpop.f32.mrb[0].mxu0
      %843 = vmatprep.mubr.bf16.mxu0 0
      %844 = vmatmul.mubr.bf16.gmra.mrb[0].mxu0 %v526
      %v845 = vpop.f32.mrb[0].mxu0
      %v846 = vadd.f32 %v297, %v845
      %v847 = vpop.f32.mrb[0].mxu0
      %v848 = vpop.f32.mrb[0].mxu0
      %v849 = vadd.f32 %v297, %v848
      %v850 = vpop.f32.mrb[0].mxu0
      %851 = vmatprep.mubr.bf16.mxu0 0
      %852 = vmatmul.mubr.bf16.gmra.mrb[0].mxu0 %v527
      %v853 = vpop.f32.mrb[0].mxu0
      %v854 = vadd.f32 %v297, %v853
      %v855 = vpop.f32.mrb[0].mxu0
      %v856 = vpop.f32.mrb[0].mxu0
      %v857 = vadd.f32 %v297, %v856
      %v858 = vpop.f32.mrb[0].mxu0
      %859 = vmatprep.mubr.bf16.mxu0 0
      %860 = vmatmul.mubr.bf16.gmra.mrb[0].mxu0 %v528
      %v861 = vpop.f32.mrb[0].mxu0
      %v862 = vadd.f32 %v297, %v861
      %v863 = vpop.f32.mrb[0].mxu0
      %v864 = vpop.f32.mrb[0].mxu0
      %v865 = vadd.f32 %v297, %v864
      %v866 = vpop.f32.mrb[0].mxu0
      %867 = vmatprep.mubr.bf16.mxu0 0
      %868 = vmatmul.mubr.bf16.gmra.mrb[0].mxu0 %v529
      %v869 = vpop.f32.mrb[0].mxu0
      %v870 = vadd.f32 %v297, %v869
      %v871 = vpop.f32.mrb[0].mxu0
      %v872 = vpop.f32.mrb[0].mxu0
      %v873 = vadd.f32 %v297, %v872
      %v874 = vpop.f32.mrb[0].mxu0
      %875 = vmatprep.mubr.bf16.mxu0 0
      %876 = vmatmul.mubr.bf16.gmra.mrb[0].mxu0 %v530
      %v877 = vpop.f32.mrb[0].mxu0
      %v878 = vadd.f32 %v297, %v877
      %v879 = vpop.f32.mrb[0].mxu0
      %v880 = vpop.f32.mrb[0].mxu0
      %v881 = vadd.f32 %v297, %v880
      %v882 = vpop.f32.mrb[0].mxu0
      %883 = vmatprep.mubr.bf16.mxu0 0
      %884 = vmatmul.mubr.bf16.gmra.mrb[0].mxu0 %v531
      %v885 = vpop.f32.mrb[0].mxu0
      %v886 = vadd.f32 %v297, %v885
      %v887 = vpop.f32.mrb[0].mxu0
      %v888 = vpop.f32.mrb[0].mxu0
      %v889 = vadd.f32 %v297, %v888
      %v890 = vpop.f32.mrb[0].mxu0
      %891 = vmatprep.mubr.bf16.mxu0 0
      %892 = vmatmul.mubr.bf16.gmra.mrb[0].mxu0 %v532
      %v893 = vpop.f32.mrb[0].mxu0
      %v894 = vadd.f32 %v297, %v893
      %v895 = vpop.f32.mrb[0].mxu0
      %v896 = vpop.f32.mrb[0].mxu0
      %v897 = vadd.f32 %v297, %v896
      %v898 = vpop.f32.mrb[0].mxu0
      %899 = vmatprep.mubr.bf16.mxu0 0
      %900 = vmatmul.mubr.bf16.gmra.mrb[0].mxu0 %v533
      %v901 = vpop.f32.mrb[0].mxu0
      %v902 = vadd.f32 %v297, %v901
      %v903 = vpop.f32.mrb[0].mxu0
      %v904 = vpop.f32.mrb[0].mxu0
      %v905 = vadd.f32 %v297, %v904
      %v906 = vpop.f32.mrb[0].mxu0
      %907 = vmatprep.mubr.bf16.mxu0 0
      %908 = vmatmul.mubr.bf16.gmra.mrb[0].mxu0 %v534
      %v909 = vpop.f32.mrb[0].mxu0
      %v910 = vadd.f32 %v297, %v909
      %v911 = vpop.f32.mrb[0].mxu0
      %v912 = vpop.f32.mrb[0].mxu0
      %v913 = vadd.f32 %v297, %v912
      %v914 = vpop.f32.mrb[0].mxu0
      %915 = vmatprep.mubr.bf16.mxu0 0
      %916 = vmatmul.mubr.bf16.gmra.mrb[0].mxu0 %v535
      %v917 = vpop.f32.mrb[0].mxu0
      %v918 = vadd.f32 %v297, %v917
      %v919 = vpop.f32.mrb[0].mxu0
      %v920 = vpop.f32.mrb[0].mxu0
      %v921 = vadd.f32 %v297, %v920
      %v922 = vpop.f32.mrb[0].mxu0
      %923 = vmatprep.mubr.bf16.mxu0 0
      %924 = vmatmul.mubr.bf16.gmra.mrb[0].mxu0 %v536
      %v925 = vpop.f32.mrb[0].mxu0
      %v926 = vadd.f32 %v297, %v925
      %v927 = vpop.f32.mrb[0].mxu0
      %v928 = vpop.f32.mrb[0].mxu0
      %v929 = vadd.f32 %v297, %v928
      %v930 = vpop.f32.mrb[0].mxu0
      %931 = vmatprep.mubr.bf16.mxu0 0
      %932 = vmatmul.mubr.bf16.gmra.mrb[0].mxu0 %v537
      %v933 = vpop.f32.mrb[0].mxu0
      %v934 = vadd.f32 %v297, %v933
      %v935 = vpop.f32.mrb[0].mxu0
      %v936 = vpop.f32.mrb[0].mxu0
      %v937 = vadd.f32 %v297, %v936
      %v938 = vpop.f32.mrb[0].mxu0
      %939 = vmatprep.mubr.bf16.mxu0 0
      %940 = vmatmul.mubr.bf16.gmra.mrb[0].mxu0 %v538
      %v941 = vpop.f32.mrb[0].mxu0
      %v942 = vadd.f32 %v297, %v941
      %v943 = vpop.f32.mrb[0].mxu0
      %v944 = vpop.f32.mrb[0].mxu0
      %v945 = vadd.f32 %v297, %v944
      %v946 = vpop.f32.mrb[0].mxu0
      %947 = vmatprep.mubr.bf16.mxu0 0
      %948 = vmatmul.mubr.bf16.gmra.mrb[0].mxu0 %v539
      %v949 = vpop.f32.mrb[0].mxu0
      %v950 = vadd.f32 %v297, %v949
      %v951 = vpop.f32.mrb[0].mxu0
      %v952 = vpop.f32.mrb[0].mxu0
      %v953 = vadd.f32 %v297, %v952
      %v954 = vpop.f32.mrb[0].mxu0
      %955 = vmatprep.mubr.bf16.mxu0 0
      %956 = vmatmul.mubr.bf16.gmra.mrb[0].mxu0 %v540
      %v957 = vpop.f32.mrb[0].mxu0
      %v958 = vadd.f32 %v297, %v957
      %v959 = vpop.f32.mrb[0].mxu0
      %v960 = vpop.f32.mrb[0].mxu0
      %v961 = vadd.f32 %v297, %v960
      %v962 = vpop.f32.mrb[0].mxu0
      %963 = vmatprep.mubr.bf16.mxu0 0
      %964 = vmatmul.mubr.bf16.gmra.mrb[0].mxu0 %v541
      %v965 = vpop.f32.mrb[0].mxu0
      %v966 = vadd.f32 %v297, %v965
      %v967 = vpop.f32.mrb[0].mxu0
      %v968 = vpop.f32.mrb[0].mxu0
      %v969 = vadd.f32 %v297, %v968
      %v970 = vpop.f32.mrb[0].mxu0
      %971 = vmatprep.mubr.bf16.mxu0 0
      %972 = vmatmul.mubr.bf16.gmra.mrb[0].mxu0 %v542
      %v973 = vpop.f32.mrb[0].mxu0
      %v974 = vadd.f32 %v297, %v973
      %v975 = vpop.f32.mrb[0].mxu0
      %v976 = vpop.f32.mrb[0].mxu0
      %v977 = vadd.f32 %v297, %v976
      %v978 = vpop.f32.mrb[0].mxu0
      %979 = vmatprep.mubr.bf16.mxu0 0
      %980 = vmatmul.mubr.bf16.gmra.mrb[0].mxu0 %v543
      %v981 = vpop.f32.mrb[0].mxu0
      %v982 = vadd.f32 %v297, %v981
      %v983 = vpop.f32.mrb[0].mxu0
      %v984 = vpop.f32.mrb[0].mxu0
      %v985 = vadd.f32 %v297, %v984
      %v986 = vpop.f32.mrb[0].mxu0
      %987 = vmatprep.mubr.bf16.mxu0 0
      %988 = vmatmul.mubr.bf16.gmra.mrb[0].mxu0 %v544
      %v989 = vpop.f32.mrb[0].mxu0
      %v990 = vadd.f32 %v297, %v989
      %v991 = vpop.f32.mrb[0].mxu0
      %v992 = vpop.f32.mrb[0].mxu0
      %v993 = vadd.f32 %v297, %v992
      %v994 = vpop.f32.mrb[0].mxu0
      %995 = vmatprep.mubr.bf16.mxu0 0
      %996 = vmatmul.mubr.bf16.gmra.mrb[0].mxu0 %v545
      %v997 = vpop.f32.mrb[0].mxu0
      %v998 = vadd.f32 %v297, %v997
      %v999 = vpop.f32.mrb[0].mxu0
      %v1000 = vpop.f32.mrb[0].mxu0
      %v1001 = vadd.f32 %v297, %v1000
      %v1002 = vpop.f32.mrb[0].mxu0
      %1003 = vmatprep.mubr.bf16.mxu0 0
      %1004 = vmatmul.mubr.bf16.gmra.mrb[0].mxu0 %v546
      %v1005 = vpop.f32.mrb[0].mxu0
      %v1006 = vadd.f32 %v297, %v1005
      %v1007 = vpop.f32.mrb[0].mxu0
      %v1008 = vpop.f32.mrb[0].mxu0
      %v1009 = vadd.f32 %v297, %v1008
      %v1010 = vpop.f32.mrb[0].mxu0
      %1011 = vmatprep.mubr.bf16.mxu0 0
      %1012 = vmatmul.mubr.bf16.gmra.mrb[0].mxu0 %v547
      %v1013 = vpop.f32.mrb[0].mxu0
      %v1014 = vadd.f32 %v297, %v1013
      %v1015 = vpop.f32.mrb[0].mxu0
      %v1016 = vpop.f32.mrb[0].mxu0
      %v1017 = vadd.f32 %v297, %v1016
      %v1018 = vpop.f32.mrb[0].mxu0
      %1019 = vmatprep.mubr.bf16.mxu0 0
      %1020 = vmatmul.mubr.bf16.gmra.mrb[0].mxu0 %v548
      %v1021 = vpop.f32.mrb[0].mxu0
      %v1022 = vadd.f32 %v297, %v1021
      %v1023 = vpop.f32.mrb[0].mxu0
      %v1024 = vpop.f32.mrb[0].mxu0
      %v1025 = vadd.f32 %v297, %v1024
      %v1026 = vpop.f32.mrb[0].mxu0
      %1027 = vmatprep.mubr.bf16.mxu0 0
      %1028 = vmatmul.mubr.bf16.gmra.mrb[0].mxu0 %v549
      %v1029 = vpop.f32.mrb[0].mxu0
      %v1030 = vadd.f32 %v297, %v1029
      %v1031 = vpop.f32.mrb[0].mxu0
      %v1032 = vpop.f32.mrb[0].mxu0
      %v1033 = vadd.f32 %v297, %v1032
      %v1034 = vpop.f32.mrb[0].mxu0
      %1035 = vmatprep.mubr.bf16.mxu0 0
      %1036 = vmatmul.mubr.bf16.gmra.mrb[0].mxu0 %v550
      %v1037 = vpop.f32.mrb[0].mxu0
      %v1038 = vadd.f32 %v297, %v1037
      %v1039 = vpop.f32.mrb[0].mxu0
      %v1040 = vpop.f32.mrb[0].mxu0
      %v1041 = vadd.f32 %v297, %v1040
      %v1042 = vpop.f32.mrb[0].mxu0
      %1043 = vmatprep.mubr.bf16.mxu0 0
      %1044 = vmatmul.mubr.bf16.gmra.mrb[0].mxu0 %v551
      %v1045 = vpop.f32.mrb[0].mxu0
      %v1046 = vadd.f32 %v297, %v1045
      %v1047 = vpop.f32.mrb[0].mxu0
      %v1048 = vpop.f32.mrb[0].mxu0
      %v1049 = vadd.f32 %v297, %v1048
      %v1050 = vpop.f32.mrb[0].mxu0
      %1051 = vmatprep.mubr.bf16.mxu0 0
      %1052 = vmatmul.mubr.bf16.gmra.mrb[0].mxu0 %v552
      %v1053 = vpop.f32.mrb[0].mxu0
      %v1054 = vadd.f32 %v297, %v1053
      %v1055 = vpop.f32.mrb[0].mxu0
      %v1056 = vpop.f32.mrb[0].mxu0
      %v1057 = vadd.f32 %v297, %v1056
      %v1058 = vpop.f32.mrb[0].mxu0
      %1059 = vmatprep.mubr.bf16.mxu0 0
      %1060 = vmatmul.mubr.bf16.gmra.mrb[0].mxu0 %v553
      %v1061 = vpop.f32.mrb[0].mxu0
      %v1062 = vadd.f32 %v297, %v1061
      %v1063 = vpop.f32.mrb[0].mxu0
      %v1064 = vpop.f32.mrb[0].mxu0
      %v1065 = vadd.f32 %v297, %v1064
      %v1066 = vpop.f32.mrb[0].mxu0
      %1067 = vmatprep.mubr.bf16.mxu0 0
      %1068 = vmatmul.mubr.bf16.gmra.mrb[0].mxu0 %v554
      %v1069 = vpop.f32.mrb[0].mxu0
      %v1070 = vadd.f32 %v297, %v1069
      %v1071 = vpop.f32.mrb[0].mxu0
      %v1072 = vpop.f32.mrb[0].mxu0
      %v1073 = vadd.f32 %v297, %v1072
      %v1074 = vpop.f32.mrb[0].mxu0
      %1075 = vmatprep.mubr.bf16.mxu0 0
      %1076 = vmatmul.mubr.bf16.gmra.mrb[0].mxu0 %v555
      %v1077 = vpop.f32.mrb[0].mxu0
      %v1078 = vadd.f32 %v297, %v1077
      %v1079 = vpop.f32.mrb[0].mxu0
      %v1080 = vpop.f32.mrb[0].mxu0
      %v1081 = vadd.f32 %v297, %v1080
      %v1082 = vpop.f32.mrb[0].mxu0
      %1083 = vmatprep.mubr.bf16.mxu0 0
      %1084 = vmatmul.mubr.bf16.gmra.mrb[0].mxu0 %v556
      %v1085 = vpop.f32.mrb[0].mxu0
      %v1086 = vadd.f32 %v297, %v1085
      %v1087 = vpop.f32.mrb[0].mxu0
      %v1088 = vpop.f32.mrb[0].mxu0
      %v1089 = vadd.f32 %v297, %v1088
      %v1090 = vpop.f32.mrb[0].mxu0
      %1091 = vmatprep.mubr.bf16.mxu0 0
      %1092 = vmatmul.mubr.bf16.gmra.mrb[0].mxu0 %v557
      %v1093 = vpop.f32.mrb[0].mxu0
      %v1094 = vadd.f32 %v297, %v1093
      %v1095 = vpop.f32.mrb[0].mxu0
      %v1096 = vpop.f32.mrb[0].mxu0
      %v1097 = vadd.f32 %v297, %v1096
      %v1098 = vpop.f32.mrb[0].mxu0
      %1099 = vmatprep.mubr.bf16.mxu0 0
      %1100 = vmatmul.mubr.bf16.gmra.mrb[0].mxu0 %v558
      %v1101 = vpop.f32.mrb[0].mxu0
      %v1102 = vadd.f32 %v297, %v1101
      %v1103 = vpop.f32.mrb[0].mxu0
      %v1104 = vpop.f32.mrb[0].mxu0
      %v1105 = vadd.f32 %v297, %v1104
      %v1106 = vpop.f32.mrb[0].mxu0
      %1107 = vdwg.mxu0
      %v1108 = vmax.f32 %v694, 0.0
      %v1109 = vmax.f32 %v697, 0.0
      %v1110 = vmax.f32 %v702, 0.0
      %v1111 = vmax.f32 %v705, 0.0
      %v1112 = vmax.f32 %v710, 0.0
      %v1113 = vmax.f32 %v713, 0.0
      %v1114 = vmax.f32 %v718, 0.0
      %v1115 = vmax.f32 %v721, 0.0
      %v1116 = vmax.f32 %v726, 0.0
      %v1117 = vmax.f32 %v729, 0.0
      %v1118 = vmax.f32 %v734, 0.0
      %v1119 = vmax.f32 %v737, 0.0
      %v1120 = vmax.f32 %v742, 0.0
      %v1121 = vmax.f32 %v745, 0.0
      %v1122 = vmax.f32 %v750, 0.0
      %v1123 = vmax.f32 %v753, 0.0
      %v1124 = vmax.f32 %v758, 0.0
      %v1125 = vmax.f32 %v761, 0.0
      %v1126 = vmax.f32 %v766, 0.0
      %v1127 = vmax.f32 %v769, 0.0
      %v1128 = vmax.f32 %v774, 0.0
      %v1129 = vmax.f32 %v777, 0.0
      %v1130 = vmax.f32 %v782, 0.0
      %v1131 = vmax.f32 %v785, 0.0
      %v1132 = vmax.f32 %v790, 0.0
      %v1133 = vmax.f32 %v793, 0.0
      %v1134 = vmax.f32 %v798, 0.0
      %v1135 = vmax.f32 %v801, 0.0
      %v1136 = vmax.f32 %v806, 0.0
      %v1137 = vmax.f32 %v809, 0.0
      %v1138 = vmax.f32 %v814, 0.0
      %v1139 = vmax.f32 %v817, 0.0
      %v1140 = vmax.f32 %v822, 0.0
      %v1141 = vmax.f32 %v825, 0.0
      %v1142 = vmax.f32 %v830, 0.0
      %v1143 = vmax.f32 %v833, 0.0
      %v1144 = vmax.f32 %v838, 0.0
      %v1145 = vmax.f32 %v841, 0.0
      %v1146 = vmax.f32 %v846, 0.0
      %v1147 = vmax.f32 %v849, 0.0
      %v1148 = vmax.f32 %v854, 0.0
      %v1149 = vmax.f32 %v857, 0.0
      %v1150 = vmax.f32 %v862, 0.0
      %v1151 = vmax.f32 %v865, 0.0
      %v1152 = vmax.f32 %v870, 0.0
      %v1153 = vmax.f32 %v873, 0.0
      %v1154 = vmax.f32 %v878, 0.0
      %v1155 = vmax.f32 %v881, 0.0
      %v1156 = vmax.f32 %v886, 0.0
      %v1157 = vmax.f32 %v889, 0.0
      %v1158 = vmax.f32 %v894, 0.0
      %v1159 = vmax.f32 %v897, 0.0
      %v1160 = vmax.f32 %v902, 0.0
      %v1161 = vmax.f32 %v905, 0.0
      %v1162 = vmax.f32 %v910, 0.0
      %v1163 = vmax.f32 %v913, 0.0
      %v1164 = vmax.f32 %v918, 0.0
      %v1165 = vmax.f32 %v921, 0.0
      %v1166 = vmax.f32 %v926, 0.0
      %v1167 = vmax.f32 %v929, 0.0
      %v1168 = vmax.f32 %v934, 0.0
      %v1169 = vmax.f32 %v937, 0.0
      %v1170 = vmax.f32 %v942, 0.0
      %v1171 = vmax.f32 %v945, 0.0
      %v1172 = vmax.f32 %v950, 0.0
      %v1173 = vmax.f32 %v953, 0.0
      %v1174 = vmax.f32 %v958, 0.0
      %v1175 = vmax.f32 %v961, 0.0
      %v1176 = vmax.f32 %v966, 0.0
      %v1177 = vmax.f32 %v969, 0.0
      %v1178 = vmax.f32 %v974, 0.0
      %v1179 = vmax.f32 %v977, 0.0
      %v1180 = vmax.f32 %v982, 0.0
      %v1181 = vmax.f32 %v985, 0.0
      %v1182 = vmax.f32 %v990, 0.0
      %v1183 = vmax.f32 %v993, 0.0
      %v1184 = vmax.f32 %v998, 0.0
      %v1185 = vmax.f32 %v1001, 0.0
      %v1186 = vmax.f32 %v1006, 0.0
      %v1187 = vmax.f32 %v1009, 0.0
      %v1188 = vmax.f32 %v1014, 0.0
      %v1189 = vmax.f32 %v1017, 0.0
      %v1190 = vmax.f32 %v1022, 0.0
      %v1191 = vmax.f32 %v1025, 0.0
      %v1192 = vmax.f32 %v1030, 0.0
      %v1193 = vmax.f32 %v1033, 0.0
      %v1194 = vmax.f32 %v1038, 0.0
      %v1195 = vmax.f32 %v1041, 0.0
      %v1196 = vmax.f32 %v1046, 0.0
      %v1197 = vmax.f32 %v1049, 0.0
      %v1198 = vmax.f32 %v1054, 0.0
      %v1199 = vmax.f32 %v1057, 0.0
      %v1200 = vmax.f32 %v1062, 0.0
      %v1201 = vmax.f32 %v1065, 0.0
      %v1202 = vmax.f32 %v1070, 0.0
      %v1203 = vmax.f32 %v1073, 0.0
      %v1204 = vmax.f32 %v1078, 0.0
      %v1205 = vmax.f32 %v1081, 0.0
      %v1206 = vmax.f32 %v1086, 0.0
      %v1207 = vmax.f32 %v1089, 0.0
      %v1208 = vmax.f32 %v1094, 0.0
      %v1209 = vmax.f32 %v1097, 0.0
      %v1210 = vmax.f32 %v1102, 0.0
      %v1211 = vmax.f32 %v1105, 0.0
      %v1212 = vmax.f32 %v1108, %v1134
      %v1213 = vmax.f32 %v1109, %v1135
      %v1214 = vmax.f32 %v1110, %v1136
      %v1215 = vmax.f32 %v1111, %v1137
      %v1216 = vmax.f32 %v1112, %v1138
      %v1217 = vmax.f32 %v1113, %v1139
      %v1218 = vmax.f32 %v1114, %v1140
      %v1219 = vmax.f32 %v1115, %v1141
      %v1220 = vmax.f32 %v1116, %v1142
      %v1221 = vmax.f32 %v1117, %v1143
      %v1222 = vmax.f32 %v1118, %v1144
      %v1223 = vmax.f32 %v1119, %v1145
      %v1224 = vmax.f32 %v1120, %v1146
      %v1225 = vmax.f32 %v1121, %v1147
      %v1226 = vmax.f32 %v1122, %v1148
      %v1227 = vmax.f32 %v1123, %v1149
      %v1228 = vmax.f32 %v1124, %v1150
      %v1229 = vmax.f32 %v1125, %v1151
      %v1230 = vmax.f32 %v1126, %v1152
      %v1231 = vmax.f32 %v1127, %v1153
      %v1232 = vmax.f32 %v1128, %v1154
      %v1233 = vmax.f32 %v1129, %v1155
      %v1234 = vmax.f32 %v1130, %v1156
      %v1235 = vmax.f32 %v1131, %v1157
      %v1236 = vmax.f32 %v1132, %v1158
      %v1237 = vmax.f32 %v1133, %v1159
      %v1238 = vmax.f32 %v1160, %v1186
      %v1239 = vmax.f32 %v1161, %v1187
      %v1240 = vmax.f32 %v1162, %v1188
      %v1241 = vmax.f32 %v1163, %v1189
      %v1242 = vmax.f32 %v1164, %v1190
      %v1243 = vmax.f32 %v1165, %v1191
      %v1244 = vmax.f32 %v1166, %v1192
      %v1245 = vmax.f32 %v1167, %v1193
      %v1246 = vmax.f32 %v1168, %v1194
      %v1247 = vmax.f32 %v1169, %v1195
      %v1248 = vmax.f32 %v1170, %v1196
      %v1249 = vmax.f32 %v1171, %v1197
      %v1250 = vmax.f32 %v1172, %v1198
      %v1251 = vmax.f32 %v1173, %v1199
      %v1252 = vmax.f32 %v1174, %v1200
      %v1253 = vmax.f32 %v1175, %v1201
      %v1254 = vmax.f32 %v1176, %v1202
      %v1255 = vmax.f32 %v1177, %v1203
      %v1256 = vmax.f32 %v1178, %v1204
      %v1257 = vmax.f32 %v1179, %v1205
      %v1258 = vmax.f32 %v1180, %v1206
      %v1259 = vmax.f32 %v1181, %v1207
      %v1260 = vmax.f32 %v1182, %v1208
      %v1261 = vmax.f32 %v1183, %v1209
      %v1262 = vmax.f32 %v1184, %v1210
      %v1263 = vmax.f32 %v1185, %v1211
      %v1264 = vmax.f32 %v1212, %v1238
      %v1265 = vmax.f32 %v1213, %v1239
      %v1266 = vmax.f32 %v1214, %v1240
      %v1267 = vmax.f32 %v1215, %v1241
      %v1268 = vmax.f32 %v1216, %v1242
      %v1269 = vmax.f32 %v1217, %v1243
      %v1270 = vmax.f32 %v1218, %v1244
      %v1271 = vmax.f32 %v1219, %v1245
      %v1272 = vmax.f32 %v1220, %v1246
      %v1273 = vmax.f32 %v1221, %v1247
      %v1274 = vmax.f32 %v1222, %v1248
      %v1275 = vmax.f32 %v1223, %v1249
      %v1276 = vmax.f32 %v1224, %v1250
      %v1277 = vmax.f32 %v1225, %v1251
      %v1278 = vmax.f32 %v1226, %v1252
      %v1279 = vmax.f32 %v1227, %v1253
      %v1280 = vmax.f32 %v1228, %v1254
      %v1281 = vmax.f32 %v1229, %v1255
      %v1282 = vmax.f32 %v1230, %v1256
      %v1283 = vmax.f32 %v1231, %v1257
      %v1284 = vmax.f32 %v1232, %v1258
      %v1285 = vmax.f32 %v1233, %v1259
      %v1286 = vmax.f32 %v1234, %v1260
      %v1287 = vmax.f32 %v1235, %v1261
      %v1288 = vmax.f32 %v1236, %v1262
      %v1289 = vmax.f32 %v1237, %v1263
      %v1290 = vpack.c.bf16 %v1265, %v1264
      %v1291 = vpack.c.bf16 %v1267, %v1266
      %v1292 = vpack.c.bf16 %v1269, %v1268
      %v1293 = vpack.c.bf16 %v1271, %v1270
      %v1294 = vpack.c.bf16 %v1273, %v1272
      %v1295 = vpack.c.bf16 %v1275, %v1274
      %v1296 = vpack.c.bf16 %v1277, %v1276
      %v1297 = vpack.c.bf16 %v1279, %v1278
      %v1298 = vpack.c.bf16 %v1281, %v1280
      %v1299 = vpack.c.bf16 %v1283, %v1282
      %v1300 = vpack.c.bf16 %v1285, %v1284
      %v1301 = vpack.c.bf16 %v1287, %v1286
      %v1302 = vpack.c.bf16 %v1289, %v1288
      %v1316 = vunpack.c.l.b16 %v1290
      %v1317 = vunpack.c.h.b16 %v1290
      %v1318 = vunpack.c.l.b16 %v1291
      %v1319 = vunpack.c.h.b16 %v1291
      %v1320 = vunpack.c.l.b16 %v1292
      %v1321 = vunpack.c.h.b16 %v1292
      %v1322 = vunpack.c.l.b16 %v1293
      %v1323 = vunpack.c.h.b16 %v1293
      %v1324 = vunpack.c.l.b16 %v1294
      %v1325 = vunpack.c.h.b16 %v1294
      %v1326 = vunpack.c.l.b16 %v1295
      %v1327 = vunpack.c.h.b16 %v1295
      %v1328 = vunpack.c.l.b16 %v1296
      %v1329 = vunpack.c.h.b16 %v1296
      %v1330 = vunpack.c.l.b16 %v1297
      %v1331 = vunpack.c.h.b16 %v1297
      %v1332 = vunpack.c.l.b16 %v1298
      %v1333 = vunpack.c.h.b16 %v1298
      %v1334 = vunpack.c.l.b16 %v1299
      %v1335 = vunpack.c.h.b16 %v1299
      %v1336 = vunpack.c.l.b16 %v1300
      %v1337 = vunpack.c.h.b16 %v1300
      %v1338 = vunpack.c.l.b16 %v1301
      %v1339 = vunpack.c.h.b16 %v1301
      %v1340 = vunpack.c.l.b16 %v1302
      %v1341 = vunpack.c.h.b16 %v1302
      %v1342 = vpack.c.b16 %v1316, %v1316
      %v1343 = vpack.c.b16 %v1317, %v1317
      %v1344 = vpack.c.b16 %v1318, %v1318
      %v1345 = vpack.c.b16 %v1319, %v1319
      %v1346 = vpack.c.b16 %v1320, %v1320
      %v1347 = vpack.c.b16 %v1321, %v1321
      %v1348 = vpack.c.b16 %v1322, %v1322
      %v1349 = vpack.c.b16 %v1323, %v1323
      %v1350 = vpack.c.b16 %v1324, %v1324
      %v1351 = vpack.c.b16 %v1325, %v1325
      %v1352 = vpack.c.b16 %v1326, %v1326
      %v1353 = vpack.c.b16 %v1327, %v1327
      %v1354 = vpack.c.b16 %v1328, %v1328
      %v1355 = vpack.c.b16 %v1329, %v1329
      %v1356 = vpack.c.b16 %v1330, %v1330
      %v1357 = vpack.c.b16 %v1331, %v1331
      %v1358 = vpack.c.b16 %v1332, %v1332
      %v1359 = vpack.c.b16 %v1333, %v1333
      %v1360 = vpack.c.b16 %v1334, %v1334
      %v1361 = vpack.c.b16 %v1335, %v1335
      %v1362 = vpack.c.b16 %v1336, %v1336
      %v1363 = vpack.c.b16 %v1337, %v1337
      %v1364 = vpack.c.b16 %v1338, %v1338
      %v1365 = vpack.c.b16 %v1339, %v1339
      %v1366 = vpack.c.b16 %v1340, %v1340
      %v1367 = vpack.c.b16 %v1341, %v1341
      %1394 = vst [vmem:[%s170] sm:$0xf] %v1342
      %1395 = vst [vmem:[%s170 + $0x4] sm:$0xf] %v1343
      %1396 = vst [vmem:[%s170 + $0x8] sm:$0xf] %v1344
      %1397 = vst [vmem:[%s170 + $0xc] sm:$0xf] %v1345
      %1398 = vst [vmem:[%s170 + $0x10] sm:$0xf] %v1346
      %1399 = vst [vmem:[%s170 + $0x14] sm:$0xf] %v1347
      %1400 = vst [vmem:[%s170 + $0x18] sm:$0xf] %v1348
      %1401 = vst [vmem:[%s170 + $0x1c] sm:$0xf] %v1349
      %1402 = vst [vmem:[%s170 + $0x20] sm:$0xf] %v1350
      %1403 = vst [vmem:[%s170 + $0x24] sm:$0xf] %v1351
      %1404 = vst [vmem:[%s170 + $0x28] sm:$0xf] %v1352
      %1405 = vst [vmem:[%s170 + $0x2c] sm:$0xf] %v1353
      %1406 = vst [vmem:[%s170 + $0x30] sm:$0xf] %v1354
      %1407 = vst [vmem:[%s170 + $0x34] sm:$0xf] %v1355
      %1408 = vst [vmem:[%s170 + $0x38] sm:$0xf] %v1356
      %1409 = vst [vmem:[%s170 + $0x3c] sm:$0xf] %v1357
      %1410 = vst [vmem:[%s170 + $0x40] sm:$0xf] %v1358
      %1411 = vst [vmem:[%s170 + $0x44] sm:$0xf] %v1359
      %1412 = vst [vmem:[%s170 + $0x48] sm:$0xf] %v1360
      %1413 = vst [vmem:[%s170 + $0x4c] sm:$0xf] %v1361
      %1414 = vst [vmem:[%s170 + $0x50] sm:$0xf] %v1362
      %1415 = vst [vmem:[%s170 + $0x54] sm:$0xf] %v1363
      %1416 = vst [vmem:[%s170 + $0x58] sm:$0xf] %v1364
      %1417 = vst [vmem:[%s170 + $0x5c] sm:$0xf] %v1365
      %1418 = vst [vmem:[%s170 + $0x60] sm:$0xf] %v1366
      %1419 = vst [vmem:[%s170 + $0x64] sm:$0xf] %v1367
      %p1420 = scmp.lt.s32.totalorder %s14, 1
      %s1421 = scalar_select %p1420, %s14, 1
      %s1422 = smul.addr %s1421, 26
      %s1423 = smul.addr %s1422, 4
      %s1424 = scalar_lea.vmem %s3, %s1423
      // Predicated region
      $region33: #{lenet_forward.3} parent=31 // pred_check
        %p1425 = pneg %p100
      $region34: #{lenet_forward.3} parent=31 // pred_check_branch
        %1427 = sbr.rel (%p1425) target = $region36
      $region35: #{lenet_forward.3} parent=31 // pred_region
        _
      $region36: #{lenet_forward.3} parent=31 // pred_fallthru
        _
    $region32: #{lenet_forward.3} parent=5 // pred_fallthru
      _
    %p1428 = scmp.le.s32.totalorder 2, %s9
    // Predicated region
    $region37: #{lenet_forward.3} parent=5 // pred_check
      %p1429 = pneg %p1428
    $region38: #{lenet_forward.3} parent=5 // pred_check_branch
      %1431 = sbr.rel (%p1429) target = $region40
    $region39: #{lenet_forward.3} parent=5 // pred_region
      %s1432 = ssub.s32 %s9, 2
      // Predicated region
      $region41: #{lenet_forward.3} parent=39 // pred_check
        %p1433 = pneg %p106
      $region42: #{lenet_forward.3} parent=39 // pred_check_branch
        %1435 = sbr.rel (%p1433) target = $region44
      $region43: #{lenet_forward.3} parent=39 // pred_region
        %p1436 = scmp.lt.s32.totalorder %s15, 1
        %s1437 = scalar_select %p1436, %s15, 1
        %s1438 = smul.addr %s1437, 26
        %s1439 = smul.addr %s1438, 4
        %s1440 = scalar_lea.vmem %s3, %s1439
      $region44: #{lenet_forward.3} parent=39 // pred_fallthru
        _
    $region40: #{lenet_forward.3} parent=5 // pred_fallthru
      _
  $region6: #{lenet_forward.3} parent=0 // loop_footer
    %s13 = sadd.s32 1, %s9
  $region7: #{lenet_forward.3} parent=0 // loop_footer_branch
    %8 = sbr.rel target = $region3
  $region8: #{lenet_forward.3} parent=0 // loop_exit
    _

// kernel: lenet_forward.4
$region0: #{lenet_forward.4}
  #allocation0 [shape = 'u32[]', space=smem, size = 0x4, offset = 0x4, fixed_abs, tag = 'smem constant byte address 0x4 - core index']
  #allocation1 [shape = 'u32[144,128]{1,0:T(1,128)}', space=vmem, size = 0x12000, scoped, tag = 'internal scratch']
  %s0 = inlined_call_operand.vmem [shape: bf16[2,128,256], index: 0, kind: input, shape index: {}]
  %s1 = inlined_call_operand.vmem [shape: bf16[256,128], index: 1, kind: input, shape index: {}]
  %s2 = inlined_call_operand.vmem [shape: f32[1,128], index: 2, kind: input, shape index: {}]
  %s3 = inlined_call_operand.vmem [shape: bf16[2,32,128], index: 3, kind: output, shape index: {}]
  %s4 = sld [smem:[#allocation0]]
  $region45: #{lenet_forward.4} parent=0
    _
  %s6 = ssub.s32 1, %s4
  %s7 = scalar_select 0, %s6, %s4
  loop: start=0, step=1, limit=4
  $region2: #{lenet_forward.4} parent=0 // loop_pre_header
    _
  $region3: #{lenet_forward.4} parent=0 // loop_header
    %s9 = sphi 0, %s13
    %p10 = scmp.ge.s32.totalorder %s9, 4
    %s19 = sphi 0, %s21
    %s22 = sphi 0, %s19
    %s23 = sphi 0, %s22
    %s39 = sphi 0, %s23
    %s43 = sphi 0, %s43
    %s45 = sphi 0, %s43
    %s46 = sphi 0, %s45
    %s60 = sphi 0, %s46
    %s64 = sphi 0, %s64
    %s66 = sphi 0, %s64
    %s67 = sphi 0, %s66
    %s81 = sphi 0, %s67
    %s87 = sphi 0, %s89
    %s90 = sphi 0, %s87
    %s91 = sphi 0, %s90
    %s107 = sphi 0, %s91
  $region4: #{lenet_forward.4} parent=0 // loop_header_branch
    %12 = sbr.rel (%p10) target = $region8
  $region5: #{lenet_forward.4} parent=0 // loop_body
    %s14 = ssub.s32 %s9, 1
    %s15 = ssub.s32 %s9, 2
    %s16 = sadd.s32 %s9, 1
    %s17 = ssub.s32 %s9, %s16
    %p18 = scmp.eq.s32.totalorder %s17, 0
    %s20 = sadd.s32 %s19, 1
    %s21 = scalar_select %p18, %s19, %s20
    %p24 = pneg %p18
    %p25 = scmp.eq.s32.totalorder %s9, 1
    %p26 = por %p24, %p25
    %p27 = scmp.ne.s32.totalorder %s19, %s22
    %p28 = scmp.eq.s32.totalorder %s9, 0
    %p29 = por %p27, %p28
    %p30 = scmp.ne.s32.totalorder %s19, %s22
    %p31 = scmp.eq.s32.totalorder %s14, 1
    %p32 = por %p30, %p31
    %p33 = scmp.ne.s32.totalorder %s22, %s23
    %p34 = scmp.eq.s32.totalorder %s14, 0
    %p35 = por %p33, %p34
    %p36 = scmp.ne.s32.totalorder %s22, %s23
    %p37 = scmp.eq.s32.totalorder %s15, 1
    %p38 = por %p36, %p37
    %p40 = scmp.ne.s32.totalorder %s23, %s39
    %p41 = scmp.eq.s32.totalorder %s15, 0
    %p42 = por %p40, %p41
    %s44 = sadd.s32 %s43, 1
    %p47 = scmp.eq.s32.totalorder %s9, 1
    %p48 = scmp.ne.s32.totalorder %s43, %s45
    %p49 = scmp.eq.s32.totalorder %s9, 0
    %p50 = por %p48, %p49
    %p51 = scmp.ne.s32.totalorder %s43, %s45
    %p52 = scmp.eq.s32.totalorder %s14, 1
    %p53 = por %p51, %p52
    %p54 = scmp.ne.s32.totalorder %s45, %s46
    %p55 = scmp.eq.s32.totalorder %s14, 0
    %p56 = por %p54, %p55
    %p57 = scmp.ne.s32.totalorder %s45, %s46
    %p58 = scmp.eq.s32.totalorder %s15, 1
    %p59 = por %p57, %p58
    %p61 = scmp.ne.s32.totalorder %s46, %s60
    %p62 = scmp.eq.s32.totalorder %s15, 0
    %p63 = por %p61, %p62
    %s65 = sadd.s32 %s64, 1
    %p68 = scmp.eq.s32.totalorder %s9, 1
    %p69 = scmp.ne.s32.totalorder %s64, %s66
    %p70 = scmp.eq.s32.totalorder %s9, 0
    %p71 = por %p69, %p70
    %p72 = scmp.ne.s32.totalorder %s64, %s66
    %p73 = scmp.eq.s32.totalorder %s14, 1
    %p74 = por %p72, %p73
    %p75 = scmp.ne.s32.totalorder %s66, %s67
    %p76 = scmp.eq.s32.totalorder %s14, 0
    %p77 = por %p75, %p76
    %p78 = scmp.ne.s32.totalorder %s66, %s67
    %p79 = scmp.eq.s32.totalorder %s15, 1
    %p80 = por %p78, %p79
    %p82 = scmp.ne.s32.totalorder %s67, %s81
    %p83 = scmp.eq.s32.totalorder %s15, 0
    %p84 = por %p82, %p83
    %s85 = ssub.s32 %s9, %s16
    %p86 = scmp.eq.s32.totalorder %s85, 0
    %s88 = sadd.s32 %s87, 1
    %s89 = scalar_select %p86, %s87, %s88
    %p92 = pneg %p86
    %p93 = scmp.eq.s32.totalorder %s9, 1
    %p94 = por %p92, %p93
    %p95 = scmp.ne.s32.totalorder %s87, %s90
    %p96 = scmp.eq.s32.totalorder %s9, 0
    %p97 = por %p95, %p96
    %p98 = scmp.ne.s32.totalorder %s87, %s90
    %p99 = scmp.eq.s32.totalorder %s14, 1
    %p100 = por %p98, %p99
    %p101 = scmp.ne.s32.totalorder %s90, %s91
    %p102 = scmp.eq.s32.totalorder %s14, 0
    %p103 = por %p101, %p102
    %p104 = scmp.ne.s32.totalorder %s90, %s91
    %p105 = scmp.eq.s32.totalorder %s15, 1
    %p106 = por %p104, %p105
    %p108 = scmp.ne.s32.totalorder %s91, %s107
    %p109 = scmp.eq.s32.totalorder %s15, 0
    %p110 = por %p108, %p109
    %p111 = scmp.le.s32.totalorder 1, %s9
    %p112 = scmp.lt.s32.totalorder %s9, 3
    %p113 = pnand %p111, %p112
    %p114 = pneg %p113
    // Predicated region
    $region9: #{lenet_forward.4} parent=5 // pred_check
      _
    $region10: #{lenet_forward.4} parent=5 // pred_check_branch
      %116 = sbr.rel (%p113) target = $region12
    $region11: #{lenet_forward.4} parent=5 // pred_region
      %s117 = ssub.s32 %s9, 1
      // Predicated region
      $region13: #{lenet_forward.4} parent=11 // pred_check
        %p118 = pneg %p56
      $region14: #{lenet_forward.4} parent=11 // pred_check_branch
        %120 = sbr.rel (%p118) target = $region16
      $region15: #{lenet_forward.4} parent=11 // pred_region
        _
      $region16: #{lenet_forward.4} parent=11 // pred_fallthru
        _
      // Predicated region
      $region17: #{lenet_forward.4} parent=11 // pred_check
        %p121 = pneg %p77
      $region18: #{lenet_forward.4} parent=11 // pred_check_branch
        %123 = sbr.rel (%p121) target = $region20
      $region19: #{lenet_forward.4} parent=11 // pred_region
        _
      $region20: #{lenet_forward.4} parent=11 // pred_fallthru
        _
    $region12: #{lenet_forward.4} parent=5 // pred_fallthru
      _
    %p124 = scmp.lt.s32.totalorder %s9, 2
    // Predicated region
    $region21: #{lenet_forward.4} parent=5 // pred_check
      %p125 = pneg %p124
    $region22: #{lenet_forward.4} parent=5 // pred_check_branch
      %127 = sbr.rel (%p125) target = $region24
    $region23: #{lenet_forward.4} parent=5 // pred_region
      // Predicated region
      $region25: #{lenet_forward.4} parent=23 // pred_check
        %p128 = pneg %p29
      $region26: #{lenet_forward.4} parent=23 // pred_check_branch
        %130 = sbr.rel (%p128) target = $region28
      $region27: #{lenet_forward.4} parent=23 // pred_region
        %p131 = scmp.lt.s32.totalorder %s9, 1
        %s132 = scalar_select %p131, %s9, 1
        %s133 = smul.addr %s132, 32
        %s134 = smul.addr %s133, 4
        %s135 = scalar_lea.vmem %s0, %s134
      $region28: #{lenet_forward.4} parent=23 // pred_fallthru
        _
    $region24: #{lenet_forward.4} parent=5 // pred_fallthru
      _
    %p136 = scmp.le.s32.totalorder 1, %s9
    %p137 = scmp.lt.s32.totalorder %s9, 3
    %p138 = pnand %p136, %p137
    %p139 = pneg %p138
    // Predicated region
    $region29: #{lenet_forward.4} parent=5 // pred_check
      _
    $region30: #{lenet_forward.4} parent=5 // pred_check_branch
      %141 = sbr.rel (%p138) target = $region32
    $region31: #{lenet_forward.4} parent=5 // pred_region
      %s142 = ssub.s32 %s9, 1
      %p143 = scmp.lt.s32.totalorder %s14, 1
      %s144 = scalar_select %p143, %s14, 1
      %s145 = smul.addr %s144, 32
      %s146 = smul.addr %s145, 4
      %s147 = scalar_lea.vmem %s0, %s146
      %p148 = pneg %p35
      %p149 = pneg %p32
      %p150 = pneg %p56
      %p151 = pneg %p53
      %p152 = pneg %p77
      %p153 = pneg %p74
      %p154 = pneg %p103
      %p155 = pneg %p100
      %p156 = scmp.lt.s32.totalorder %s14, 1
      %s157 = scalar_select %p156, %s14, 1
      %s158 = smul.addr %s157, 4
      %s159 = smul.addr %s158, 4
      %s160 = scalar_lea.vmem %s3, %s159
      %p161 = scmp.lt.s32.totalorder %s14, 1
      %s162 = scalar_select %p161, %s14, 1
      %s163 = smul.addr %s162, 32
      %s164 = smul.addr %s163, 4
      %s165 = scalar_lea.vmem %s0, %s164
      %p166 = scmp.lt.s32.totalorder %s14, 1
      %s167 = scalar_select %p166, %s14, 1
      %s168 = smul.addr %s167, 4
      %s169 = smul.addr %s168, 4
      %s170 = scalar_lea.vmem %s3, %s169
      %v172 = vld [vmem:[%s165] sm:$0xff]
      %v173 = vld [vmem:[%s165 + $0x8] sm:$0xff]
      %v174 = vld [vmem:[%s165 + $0x10] sm:$0xff]
      %v175 = vld [vmem:[%s165 + $0x18] sm:$0xff]
      %v176 = vld [vmem:[%s165 + $0x20] sm:$0xff]
      %v177 = vld [vmem:[%s165 + $0x28] sm:$0xff]
      %v178 = vld [vmem:[%s165 + $0x30] sm:$0xff]
      %v179 = vld [vmem:[%s165 + $0x38] sm:$0xff]
      %v180 = vld [vmem:[%s165 + $0x40] sm:$0xff]
      %v181 = vld [vmem:[%s165 + $0x48] sm:$0xff]
      %v182 = vld [vmem:[%s165 + $0x50] sm:$0xff]
      %v183 = vld [vmem:[%s165 + $0x58] sm:$0xff]
      %v184 = vld [vmem:[%s165 + $0x60] sm:$0xff]
      %v185 = vld [vmem:[%s165 + $0x68] sm:$0xff]
      %v186 = vld [vmem:[%s165 + $0x70] sm:$0xff]
      %v187 = vld [vmem:[%s165 + $0x78] sm:$0xff]
      %v188 = vld [vmem:[%s1] sm:$0xf]
      %v189 = vld [vmem:[%s1 + $0x4] sm:$0xf]
      %v190 = vld [vmem:[%s1 + $0x8] sm:$0xf]
      %v191 = vld [vmem:[%s1 + $0xc] sm:$0xf]
      %v192 = vld [vmem:[%s1 + $0x10] sm:$0xf]
      %v193 = vld [vmem:[%s1 + $0x14] sm:$0xf]
      %v194 = vld [vmem:[%s1 + $0x18] sm:$0xf]
      %v195 = vld [vmem:[%s1 + $0x1c] sm:$0xf]
      %v196 = vld [vmem:[%s1 + $0x20] sm:$0xf]
      %v197 = vld [vmem:[%s1 + $0x24] sm:$0xf]
      %v198 = vld [vmem:[%s1 + $0x28] sm:$0xf]
      %v199 = vld [vmem:[%s1 + $0x2c] sm:$0xf]
      %v200 = vld [vmem:[%s1 + $0x30] sm:$0xf]
      %v201 = vld [vmem:[%s1 + $0x34] sm:$0xf]
      %v202 = vld [vmem:[%s1 + $0x38] sm:$0xf]
      %v203 = vld [vmem:[%s1 + $0x3c] sm:$0xf]
      %v204 = vld [vmem:[%s1 + $0x40] sm:$0xf]
      %v205 = vld [vmem:[%s1 + $0x44] sm:$0xf]
      %v206 = vld [vmem:[%s1 + $0x48] sm:$0xf]
      %v207 = vld [vmem:[%s1 + $0x4c] sm:$0xf]
      %v208 = vld [vmem:[%s1 + $0x50] sm:$0xf]
      %v209 = vld [vmem:[%s1 + $0x54] sm:$0xf]
      %v210 = vld [vmem:[%s1 + $0x58] sm:$0xf]
      %v211 = vld [vmem:[%s1 + $0x5c] sm:$0xf]
      %v212 = vld [vmem:[%s1 + $0x60] sm:$0xf]
      %v213 = vld [vmem:[%s1 + $0x64] sm:$0xf]
      %v214 = vld [vmem:[%s1 + $0x68] sm:$0xf]
      %v215 = vld [vmem:[%s1 + $0x6c] sm:$0xf]
      %v216 = vld [vmem:[%s1 + $0x70] sm:$0xf]
      %v217 = vld [vmem:[%s1 + $0x74] sm:$0xf]
      %v218 = vld [vmem:[%s1 + $0x78] sm:$0xf]
      %v219 = vld [vmem:[%s1 + $0x7c] sm:$0xf]
      %v220 = vld [vmem:[%s2] sm:$0x1]
      %v222 = vlaneseq
      %v223 = vshrl.u32 %v222, 7
      %v224 = vsub.s32 0, %v223
      %v225 = vrot.slane %v220, %v224
      %v243 = vunpack.c.l.b16 %v172
      %v244 = vunpack.c.h.b16 %v172
      %v245 = vunpack.c.l.b16 %v173
      %v246 = vunpack.c.h.b16 %v173
      %v247 = vunpack.c.l.b16 %v174
      %v248 = vunpack.c.h.b16 %v174
      %v249 = vunpack.c.l.b16 %v175
      %v250 = vunpack.c.h.b16 %v175
      %v251 = vunpack.c.l.b16 %v176
      %v252 = vunpack.c.h.b16 %v176
      %v253 = vunpack.c.l.b16 %v177
      %v254 = vunpack.c.h.b16 %v177
      %v255 = vunpack.c.l.b16 %v178
      %v256 = vunpack.c.h.b16 %v178
      %v257 = vunpack.c.l.b16 %v179
      %v258 = vunpack.c.h.b16 %v179
      %v259 = vunpack.c.l.b16 %v180
      %v260 = vunpack.c.h.b16 %v180
      %v261 = vunpack.c.l.b16 %v181
      %v262 = vunpack.c.h.b16 %v181
      %v263 = vunpack.c.l.b16 %v182
      %v264 = vunpack.c.h.b16 %v182
      %v265 = vunpack.c.l.b16 %v183
      %v266 = vunpack.c.h.b16 %v183
      %v267 = vunpack.c.l.b16 %v184
      %v268 = vunpack.c.h.b16 %v184
      %v269 = vunpack.c.l.b16 %v185
      %v270 = vunpack.c.h.b16 %v185
      %v271 = vunpack.c.l.b16 %v186
      %v272 = vunpack.c.h.b16 %v186
      %v273 = vunpack.c.l.b16 %v187
      %v274 = vunpack.c.h.b16 %v187
      %v275 = vpack.c.b16 %v245, %v243
      %v276 = vpack.c.b16 %v246, %v244
      %v277 = vpack.c.b16 %v249, %v247
      %v278 = vpack.c.b16 %v250, %v248
      %v279 = vpack.c.b16 %v253, %v251
      %v280 = vpack.c.b16 %v254, %v252
      %v281 = vpack.c.b16 %v257, %v255
      %v282 = vpack.c.b16 %v258, %v256
      %v283 = vpack.c.b16 %v261, %v259
      %v284 = vpack.c.b16 %v262, %v260
      %v285 = vpack.c.b16 %v265, %v263
      %v286 = vpack.c.b16 %v266, %v264
      %v287 = vpack.c.b16 %v269, %v267
      %v288 = vpack.c.b16 %v270, %v268
      %v289 = vpack.c.b16 %v273, %v271
      %v290 = vpack.c.b16 %v274, %v272
      %v339 = vunpack.c.l.b16 %v188
      %v340 = vunpack.c.l.b16 %v189
      %v341 = vunpack.c.l.b16 %v190
      %v342 = vunpack.c.l.b16 %v191
      %v343 = vunpack.c.l.b16 %v192
      %v344 = vunpack.c.l.b16 %v193
      %v345 = vunpack.c.l.b16 %v194
      %v346 = vunpack.c.l.b16 %v195
      %v347 = vunpack.c.l.b16 %v196
      %v348 = vunpack.c.l.b16 %v197
      %v349 = vunpack.c.l.b16 %v198
      %v350 = vunpack.c.l.b16 %v199
      %v351 = vunpack.c.l.b16 %v200
      %v352 = vunpack.c.l.b16 %v201
      %v353 = vunpack.c.l.b16 %v202
      %v354 = vunpack.c.l.b16 %v203
      %v355 = vunpack.c.l.b16 %v204
      %v356 = vunpack.c.l.b16 %v205
      %v357 = vunpack.c.l.b16 %v206
      %v358 = vunpack.c.l.b16 %v207
      %v359 = vunpack.c.l.b16 %v208
      %v360 = vunpack.c.l.b16 %v209
      %v361 = vunpack.c.l.b16 %v210
      %v362 = vunpack.c.l.b16 %v211
      %v363 = vunpack.c.l.b16 %v212
      %v364 = vunpack.c.l.b16 %v213
      %v365 = vunpack.c.l.b16 %v214
      %v366 = vunpack.c.l.b16 %v215
      %v367 = vunpack.c.l.b16 %v216
      %v368 = vunpack.c.l.b16 %v217
      %v369 = vunpack.c.l.b16 %v218
      %v370 = vunpack.c.l.b16 %v219
      %v371 = vpack.c.b16 %v340, %v339
      %v372 = vpack.c.b16 %v342, %v341
      %v373 = vpack.c.b16 %v344, %v343
      %v374 = vpack.c.b16 %v346, %v345
      %v375 = vpack.c.b16 %v348, %v347
      %v376 = vpack.c.b16 %v350, %v349
      %v377 = vpack.c.b16 %v352, %v351
      %v378 = vpack.c.b16 %v354, %v353
      %v379 = vpack.c.b16 %v356, %v355
      %v380 = vpack.c.b16 %v358, %v357
      %v381 = vpack.c.b16 %v360, %v359
      %v382 = vpack.c.b16 %v362, %v361
      %v383 = vpack.c.b16 %v364, %v363
      %v384 = vpack.c.b16 %v366, %v365
      %v385 = vpack.c.b16 %v368, %v367
      %v386 = vpack.c.b16 %v370, %v369
      %403 = vmatprep.subr.bf16.mxu0 0
      %404 = vmatpush1.bf16.msra.mxu0 %v371
      %405 = vmatprep.subr.bf16.mxu0 0
      %406 = vmatpush1.bf16.msra.mxu0 %v372
      %407 = vmatprep.subr.bf16.mxu0 0
      %408 = vmatpush1.bf16.msra.mxu0 %v373
      %409 = vmatprep.subr.bf16.mxu0 0
      %410 = vmatpush1.bf16.msra.mxu0 %v374
      %411 = vmatprep.subr.bf16.mxu0 0
      %412 = vmatpush1.bf16.msra.mxu0 %v375
      %413 = vmatprep.subr.bf16.mxu0 0
      %414 = vmatpush1.bf16.msra.mxu0 %v376
      %415 = vmatprep.subr.bf16.mxu0 0
      %416 = vmatpush1.bf16.msra.mxu0 %v377
      %417 = vmatprep.subr.bf16.mxu0 0
      %418 = vmatpush1.bf16.msra.mxu0 %v378
      %419 = vmatprep.subr.bf16.mxu0 0
      %420 = vmatpush1.bf16.msra.mxu0 %v379
      %421 = vmatprep.subr.bf16.mxu0 0
      %422 = vmatpush1.bf16.msra.mxu0 %v380
      %423 = vmatprep.subr.bf16.mxu0 0
      %424 = vmatpush1.bf16.msra.mxu0 %v381
      %425 = vmatprep.subr.bf16.mxu0 0
      %426 = vmatpush1.bf16.msra.mxu0 %v382
      %427 = vmatprep.subr.bf16.mxu0 0
      %428 = vmatpush1.bf16.msra.mxu0 %v383
      %429 = vmatprep.subr.bf16.mxu0 0
      %430 = vmatpush1.bf16.msra.mxu0 %v384
      %431 = vmatprep.subr.bf16.mxu0 0
      %432 = vmatpush1.bf16.msra.mxu0 %v385
      %433 = vmatprep.subr.bf16.mxu0 0
      %434 = vmatpush1.bf16.msra.mxu0 %v386
      %435 = vmatprep.mubr.bf16.mxu0 %v276
      %436 = vmatmul.mubr.bf16.gmra.mrb[0].mxu0 %v275
      %v437 = vpop.f32.mrb[0].mxu0
      %v438 = vadd.f32 %v225, %v437
      %v439 = vpop.f32.mrb[0].mxu0
      %v440 = vpop.f32.mrb[0].mxu0
      %v441 = vadd.f32 %v225, %v440
      %v442 = vpop.f32.mrb[0].mxu0
      %443 = vmatprep.mubr.bf16.mxu0 %v278
      %444 = vmatmul.mubr.bf16.gmra.mrb[0].mxu0 %v277
      %v445 = vpop.f32.mrb[0].mxu0
      %v446 = vadd.f32 %v225, %v445
      %v447 = vpop.f32.mrb[0].mxu0
      %v448 = vpop.f32.mrb[0].mxu0
      %v449 = vadd.f32 %v225, %v448
      %v450 = vpop.f32.mrb[0].mxu0
      %451 = vmatprep.mubr.bf16.mxu0 %v280
      %452 = vmatmul.mubr.bf16.gmra.mrb[0].mxu0 %v279
      %v453 = vpop.f32.mrb[0].mxu0
      %v454 = vadd.f32 %v225, %v453
      %v455 = vpop.f32.mrb[0].mxu0
      %v456 = vpop.f32.mrb[0].mxu0
      %v457 = vadd.f32 %v225, %v456
      %v458 = vpop.f32.mrb[0].mxu0
      %459 = vmatprep.mubr.bf16.mxu0 %v282
      %460 = vmatmul.mubr.bf16.gmra.mrb[0].mxu0 %v281
      %v461 = vpop.f32.mrb[0].mxu0
      %v462 = vadd.f32 %v225, %v461
      %v463 = vpop.f32.mrb[0].mxu0
      %v464 = vpop.f32.mrb[0].mxu0
      %v465 = vadd.f32 %v225, %v464
      %v466 = vpop.f32.mrb[0].mxu0
      %467 = vmatprep.mubr.bf16.mxu0 %v284
      %468 = vmatmul.mubr.bf16.gmra.mrb[0].mxu0 %v283
      %v469 = vpop.f32.mrb[0].mxu0
      %v470 = vadd.f32 %v225, %v469
      %v471 = vpop.f32.mrb[0].mxu0
      %v472 = vpop.f32.mrb[0].mxu0
      %v473 = vadd.f32 %v225, %v472
      %v474 = vpop.f32.mrb[0].mxu0
      %475 = vmatprep.mubr.bf16.mxu0 %v286
      %476 = vmatmul.mubr.bf16.gmra.mrb[0].mxu0 %v285
      %v477 = vpop.f32.mrb[0].mxu0
      %v478 = vadd.f32 %v225, %v477
      %v479 = vpop.f32.mrb[0].mxu0
      %v480 = vpop.f32.mrb[0].mxu0
      %v481 = vadd.f32 %v225, %v480
      %v482 = vpop.f32.mrb[0].mxu0
      %483 = vmatprep.mubr.bf16.mxu0 %v288
      %484 = vmatmul.mubr.bf16.gmra.mrb[0].mxu0 %v287
      %v485 = vpop.f32.mrb[0].mxu0
      %v486 = vadd.f32 %v225, %v485
      %v487 = vpop.f32.mrb[0].mxu0
      %v488 = vpop.f32.mrb[0].mxu0
      %v489 = vadd.f32 %v225, %v488
      %v490 = vpop.f32.mrb[0].mxu0
      %491 = vmatprep.mubr.bf16.mxu0 %v290
      %492 = vmatmul.mubr.bf16.gmra.mrb[0].mxu0 %v289
      %v493 = vpop.f32.mrb[0].mxu0
      %v494 = vadd.f32 %v225, %v493
      %v495 = vpop.f32.mrb[0].mxu0
      %v496 = vpop.f32.mrb[0].mxu0
      %v497 = vadd.f32 %v225, %v496
      %v498 = vpop.f32.mrb[0].mxu0
      %499 = vdwg.mxu0
      %v500 = vmax.f32 %v438, 0.0
      %v501 = vmax.f32 %v441, 0.0
      %v502 = vmax.f32 %v446, 0.0
      %v503 = vmax.f32 %v449, 0.0
      %v504 = vmax.f32 %v454, 0.0
      %v505 = vmax.f32 %v457, 0.0
      %v506 = vmax.f32 %v462, 0.0
      %v507 = vmax.f32 %v465, 0.0
      %v508 = vmax.f32 %v470, 0.0
      %v509 = vmax.f32 %v473, 0.0
      %v510 = vmax.f32 %v478, 0.0
      %v511 = vmax.f32 %v481, 0.0
      %v512 = vmax.f32 %v486, 0.0
      %v513 = vmax.f32 %v489, 0.0
      %v514 = vmax.f32 %v494, 0.0
      %v515 = vmax.f32 %v497, 0.0
      %v516 = vmax.f32 %v500, %v504
      %v517 = vmax.f32 %v501, %v505
      %v518 = vmax.f32 %v502, %v506
      %v519 = vmax.f32 %v503, %v507
      %v520 = vmax.f32 %v508, %v512
      %v521 = vmax.f32 %v509, %v513
      %v522 = vmax.f32 %v510, %v514
      %v523 = vmax.f32 %v511, %v515
      %v524 = vmax.f32 %v516, %v520
      %v525 = vmax.f32 %v517, %v521
      %v526 = vmax.f32 %v518, %v522
      %v527 = vmax.f32 %v519, %v523
      %v528 = vpack.c.bf16 %v525, %v524
      %v529 = vpack.c.bf16 %v527, %v526
      %v532 = vunpack.c.l.b16 %v528
      %v533 = vunpack.c.h.b16 %v528
      %v534 = vunpack.c.l.b16 %v529
      %v535 = vunpack.c.h.b16 %v529
      %v536 = vpack.c.b16 %v532, %v532
      %v537 = vpack.c.b16 %v533, %v533
      %v538 = vpack.c.b16 %v534, %v534
      %v539 = vpack.c.b16 %v535, %v535
      %544 = vst [vmem:[%s170] sm:$0xf] %v536
      %545 = vst [vmem:[%s170 + $0x4] sm:$0xf] %v537
      %546 = vst [vmem:[%s170 + $0x8] sm:$0xf] %v538
      %547 = vst [vmem:[%s170 + $0xc] sm:$0xf] %v539
      %p548 = scmp.lt.s32.totalorder %s14, 1
      %s549 = scalar_select %p548, %s14, 1
      %s550 = smul.addr %s549, 4
      %s551 = smul.addr %s550, 4
      %s552 = scalar_lea.vmem %s3, %s551
      // Predicated region
      $region33: #{lenet_forward.4} parent=31 // pred_check
        %p553 = pneg %p100
      $region34: #{lenet_forward.4} parent=31 // pred_check_branch
        %555 = sbr.rel (%p553) target = $region36
      $region35: #{lenet_forward.4} parent=31 // pred_region
        _
      $region36: #{lenet_forward.4} parent=31 // pred_fallthru
        _
    $region32: #{lenet_forward.4} parent=5 // pred_fallthru
      _
    %p556 = scmp.le.s32.totalorder 2, %s9
    // Predicated region
    $region37: #{lenet_forward.4} parent=5 // pred_check
      %p557 = pneg %p556
    $region38: #{lenet_forward.4} parent=5 // pred_check_branch
      %559 = sbr.rel (%p557) target = $region40
    $region39: #{lenet_forward.4} parent=5 // pred_region
      %s560 = ssub.s32 %s9, 2
      // Predicated region
      $region41: #{lenet_forward.4} parent=39 // pred_check
        %p561 = pneg %p106
      $region42: #{lenet_forward.4} parent=39 // pred_check_branch
        %563 = sbr.rel (%p561) target = $region44
      $region43: #{lenet_forward.4} parent=39 // pred_region
        %p564 = scmp.lt.s32.totalorder %s15, 1
        %s565 = scalar_select %p564, %s15, 1
        %s566 = smul.addr %s565, 4
        %s567 = smul.addr %s566, 4
        %s568 = scalar_lea.vmem %s3, %s567
      $region44: #{lenet_forward.4} parent=39 // pred_fallthru
        _
    $region40: #{lenet_forward.4} parent=5 // pred_fallthru
      _
  $region6: #{lenet_forward.4} parent=0 // loop_footer
    %s13 = sadd.s32 1, %s9
  $region7: #{lenet_forward.4} parent=0 // loop_footer_branch
    %8 = sbr.rel target = $region3
  $region8: #{lenet_forward.4} parent=0 // loop_exit
    _

// kernel: lenet_forward.5
$region0: #{lenet_forward.5}
  #allocation0 [shape = 'u32[]', space=smem, size = 0x4, offset = 0x4, fixed_abs, tag = 'smem constant byte address 0x4 - core index']
  #allocation1 [shape = 'u32[144,128]{1,0:T(1,128)}', space=vmem, size = 0x12000, scoped, tag = 'internal scratch']
  %s0 = inlined_call_operand.vmem [shape: bf16[2,512], index: 0, kind: input, shape index: {}]
  %s1 = inlined_call_operand.vmem [shape: bf16[512,128], index: 1, kind: input, shape index: {}]
  %s2 = inlined_call_operand.vmem [shape: f32[1,128], index: 2, kind: input, shape index: {}]
  %s3 = inlined_call_operand.vmem [shape: bf16[128,128], index: 3, kind: input, shape index: {}]
  %s4 = inlined_call_operand.vmem [shape: f32[1,128], index: 4, kind: input, shape index: {}]
  %s5 = inlined_call_operand.vmem [shape: bf16[128,128], index: 5, kind: input, shape index: {}]
  %s6 = inlined_call_operand.vmem [shape: f32[1,128], index: 6, kind: input, shape index: {}]
  %s7 = inlined_call_operand.hbm [shape: f32[2,128], index: 7, kind: output, shape index: {}]
  %s8 = sld [smem:[#allocation0]]
  $region38: #{lenet_forward.5} parent=0
    _
  %s10 = ssub.s32 1, %s8
  %s11 = scalar_select 0, %s10, %s8
  $region1: #{lenet_forward.5} parent=0
    #allocation2 [shape = 'u8[1024]{0}', space=vmem, size = 0x400, scoped, tag = 'output window, operand 0, single buffered']
    #allocation3 [shape = 's32[1]{0}', space=sflag, size = 0x4, scoped, tag = 'scoped memory for lenet_forward.5']
    %12 = vsyncpa [#allocation3], 0
    // Predicated region
    $region2: #{lenet_forward.5} parent=1 // pred_check
      _
    $region3: #{lenet_forward.5} parent=1 // pred_check_branch
      %14 = sbr.rel (0) target = $region5
    $region4: #{lenet_forward.5} parent=1 // pred_region
      _
    $region5: #{lenet_forward.5} parent=1 // pred_fallthru
      _
    // Predicated region
    $region6: #{lenet_forward.5} parent=1 // pred_check
      _
    $region7: #{lenet_forward.5} parent=1 // pred_check_branch
      %16 = sbr.rel (0) target = $region9
    $region8: #{lenet_forward.5} parent=1 // pred_region
      _
    $region9: #{lenet_forward.5} parent=1 // pred_fallthru
      _
    // Predicated region
    $region10: #{lenet_forward.5} parent=1 // pred_check
      _
    $region11: #{lenet_forward.5} parent=1 // pred_check_branch
      %18 = sbr.rel (0) target = $region13
    $region12: #{lenet_forward.5} parent=1 // pred_region
      _
    $region13: #{lenet_forward.5} parent=1 // pred_fallthru
      _
    // Predicated region
    $region14: #{lenet_forward.5} parent=1 // pred_check
      _
    $region15: #{lenet_forward.5} parent=1 // pred_check_branch
      %20 = sbr.rel (0) target = $region17
    $region16: #{lenet_forward.5} parent=1 // pred_region
      _
    $region17: #{lenet_forward.5} parent=1 // pred_fallthru
      _
    // Predicated region
    $region18: #{lenet_forward.5} parent=1 // pred_check
      _
    $region19: #{lenet_forward.5} parent=1 // pred_check_branch
      %22 = sbr.rel (0) target = $region21
    $region20: #{lenet_forward.5} parent=1 // pred_region
      _
    $region21: #{lenet_forward.5} parent=1 // pred_fallthru
      _
    // Predicated region
    $region22: #{lenet_forward.5} parent=1 // pred_check
      _
    $region23: #{lenet_forward.5} parent=1 // pred_check_branch
      %24 = sbr.rel (0) target = $region25
    $region24: #{lenet_forward.5} parent=1 // pred_region
      _
    $region25: #{lenet_forward.5} parent=1 // pred_fallthru
      _
    // Predicated region
    $region26: #{lenet_forward.5} parent=1 // pred_check
      _
    $region27: #{lenet_forward.5} parent=1 // pred_check_branch
      %26 = sbr.rel (0) target = $region29
    $region28: #{lenet_forward.5} parent=1 // pred_region
      _
    $region29: #{lenet_forward.5} parent=1 // pred_fallthru
      _
    %v28 = vld [vmem:[%s0] sm:$0xf]
    %v29 = vld [vmem:[%s1] sm:$0xf]
    %v30 = vld [vmem:[%s1 + $0x4] sm:$0xf]
    %v31 = vld [vmem:[%s1 + $0x8] sm:$0xf]
    %v32 = vld [vmem:[%s1 + $0xc] sm:$0xf]
    %v33 = vld [vmem:[%s1 + $0x10] sm:$0xf]
    %v34 = vld [vmem:[%s1 + $0x14] sm:$0xf]
    %v35 = vld [vmem:[%s1 + $0x18] sm:$0xf]
    %v36 = vld [vmem:[%s1 + $0x1c] sm:$0xf]
    %v37 = vld [vmem:[%s1 + $0x20] sm:$0xf]
    %v38 = vld [vmem:[%s1 + $0x24] sm:$0xf]
    %v39 = vld [vmem:[%s1 + $0x28] sm:$0xf]
    %v40 = vld [vmem:[%s1 + $0x2c] sm:$0xf]
    %v41 = vld [vmem:[%s1 + $0x30] sm:$0xf]
    %v42 = vld [vmem:[%s1 + $0x34] sm:$0xf]
    %v43 = vld [vmem:[%s1 + $0x38] sm:$0xf]
    %v44 = vld [vmem:[%s1 + $0x3c] sm:$0xf]
    %v45 = vld [vmem:[%s1 + $0x40] sm:$0xf]
    %v46 = vld [vmem:[%s1 + $0x44] sm:$0xf]
    %v47 = vld [vmem:[%s1 + $0x48] sm:$0xf]
    %v48 = vld [vmem:[%s1 + $0x4c] sm:$0xf]
    %v49 = vld [vmem:[%s1 + $0x50] sm:$0xf]
    %v50 = vld [vmem:[%s1 + $0x54] sm:$0xf]
    %v51 = vld [vmem:[%s1 + $0x58] sm:$0xf]
    %v52 = vld [vmem:[%s1 + $0x5c] sm:$0xf]
    %v53 = vld [vmem:[%s1 + $0x60] sm:$0xf]
    %v54 = vld [vmem:[%s1 + $0x64] sm:$0xf]
    %v55 = vld [vmem:[%s1 + $0x68] sm:$0xf]
    %v56 = vld [vmem:[%s1 + $0x6c] sm:$0xf]
    %v57 = vld [vmem:[%s1 + $0x70] sm:$0xf]
    %v58 = vld [vmem:[%s1 + $0x74] sm:$0xf]
    %v59 = vld [vmem:[%s1 + $0x78] sm:$0xf]
    %v60 = vld [vmem:[%s1 + $0x7c] sm:$0xf]
    %v61 = vld [vmem:[%s1 + $0x80] sm:$0xf]
    %v62 = vld [vmem:[%s1 + $0x84] sm:$0xf]
    %v63 = vld [vmem:[%s1 + $0x88] sm:$0xf]
    %v64 = vld [vmem:[%s1 + $0x8c] sm:$0xf]
    %v65 = vld [vmem:[%s1 + $0x90] sm:$0xf]
    %v66 = vld [vmem:[%s1 + $0x94] sm:$0xf]
    %v67 = vld [vmem:[%s1 + $0x98] sm:$0xf]
    %v68 = vld [vmem:[%s1 + $0x9c] sm:$0xf]
    %v69 = vld [vmem:[%s1 + $0xa0] sm:$0xf]
    %v70 = vld [vmem:[%s1 + $0xa4] sm:$0xf]
    %v71 = vld [vmem:[%s1 + $0xa8] sm:$0xf]
    %v72 = vld [vmem:[%s1 + $0xac] sm:$0xf]
    %v73 = vld [vmem:[%s1 + $0xb0] sm:$0xf]
    %v74 = vld [vmem:[%s1 + $0xb4] sm:$0xf]
    %v75 = vld [vmem:[%s1 + $0xb8] sm:$0xf]
    %v76 = vld [vmem:[%s1 + $0xbc] sm:$0xf]
    %v77 = vld [vmem:[%s1 + $0xc0] sm:$0xf]
    %v78 = vld [vmem:[%s1 + $0xc4] sm:$0xf]
    %v79 = vld [vmem:[%s1 + $0xc8] sm:$0xf]
    %v80 = vld [vmem:[%s1 + $0xcc] sm:$0xf]
    %v81 = vld [vmem:[%s1 + $0xd0] sm:$0xf]
    %v82 = vld [vmem:[%s1 + $0xd4] sm:$0xf]
    %v83 = vld [vmem:[%s1 + $0xd8] sm:$0xf]
    %v84 = vld [vmem:[%s1 + $0xdc] sm:$0xf]
    %v85 = vld [vmem:[%s1 + $0xe0] sm:$0xf]
    %v86 = vld [vmem:[%s1 + $0xe4] sm:$0xf]
    %v87 = vld [vmem:[%s1 + $0xe8] sm:$0xf]
    %v88 = vld [vmem:[%s1 + $0xec] sm:$0xf]
    %v89 = vld [vmem:[%s1 + $0xf0] sm:$0xf]
    %v90 = vld [vmem:[%s1 + $0xf4] sm:$0xf]
    %v91 = vld [vmem:[%s1 + $0xf8] sm:$0xf]
    %v92 = vld [vmem:[%s1 + $0xfc] sm:$0xf]
    %v93 = vld [vmem:[%s2] sm:$0x1]
    %v95 = vlaneseq
    %v96 = vshrl.u32 %v95, 7
    %v97 = vsub.s32 0, %v96
    %v98 = vrot.slane %v93, %v97
    %v102 = vunpack.c.l.s4 1966171168
    %v103 = vunpack.c.0.s8 %v102
    %v104 = vlaneseq
    %v105 = vshrl.u32 %v104, 7
    %v106 = vsub.s32 %v103, %v105
    %v107 = vrot.slane %v28, %v106
    %v108 = vcombine.high %v107, %v107
    %v110 = vunpack.c.l.s4 1966171168
    %v111 = vunpack.c.0.s8 %v110
    %v112 = vlaneseq
    %v113 = vshrl.u32 %v112, 7
    %v114 = vsub.s32 %v111, %v113
    %v115 = vrot.slane %v107, %v114
    %v117 = vunpack.c.l.s4 1966171168
    %v118 = vunpack.c.0.s8 %v117
    %v119 = vlaneseq
    %v120 = vshrl.u32 %v119, 7
    %v121 = vsub.s32 %v118, %v120
    %v122 = vrot.slane %v108, %v121
    %v123 = vcombine.high %v115, %v115
    %v124 = vcombine.high %v122, %v122
    %v193 = vunpack.c.l.b16 %v29
    %v194 = vunpack.c.l.b16 %v30
    %v195 = vunpack.c.l.b16 %v31
    %v196 = vunpack.c.l.b16 %v32
    %v197 = vunpack.c.l.b16 %v33
    %v198 = vunpack.c.l.b16 %v34
    %v199 = vunpack.c.l.b16 %v35
    %v200 = vunpack.c.l.b16 %v36
    %v201 = vunpack.c.l.b16 %v37
    %v202 = vunpack.c.l.b16 %v38
    %v203 = vunpack.c.l.b16 %v39
    %v204 = vunpack.c.l.b16 %v40
    %v205 = vunpack.c.l.b16 %v41
    %v206 = vunpack.c.l.b16 %v42
    %v207 = vunpack.c.l.b16 %v43
    %v208 = vunpack.c.l.b16 %v44
    %v209 = vunpack.c.l.b16 %v45
    %v210 = vunpack.c.l.b16 %v46
    %v211 = vunpack.c.l.b16 %v47
    %v212 = vunpack.c.l.b16 %v48
    %v213 = vunpack.c.l.b16 %v49
    %v214 = vunpack.c.l.b16 %v50
    %v215 = vunpack.c.l.b16 %v51
    %v216 = vunpack.c.l.b16 %v52
    %v217 = vunpack.c.l.b16 %v53
    %v218 = vunpack.c.l.b16 %v54
    %v219 = vunpack.c.l.b16 %v55
    %v220 = vunpack.c.l.b16 %v56
    %v221 = vunpack.c.l.b16 %v57
    %v222 = vunpack.c.l.b16 %v58
    %v223 = vunpack.c.l.b16 %v59
    %v224 = vunpack.c.l.b16 %v60
    %v225 = vunpack.c.l.b16 %v61
    %v226 = vunpack.c.l.b16 %v62
    %v227 = vunpack.c.l.b16 %v63
    %v228 = vunpack.c.l.b16 %v64
    %v229 = vunpack.c.l.b16 %v65
    %v230 = vunpack.c.l.b16 %v66
    %v231 = vunpack.c.l.b16 %v67
    %v232 = vunpack.c.l.b16 %v68
    %v233 = vunpack.c.l.b16 %v69
    %v234 = vunpack.c.l.b16 %v70
    %v235 = vunpack.c.l.b16 %v71
    %v236 = vunpack.c.l.b16 %v72
    %v237 = vunpack.c.l.b16 %v73
    %v238 = vunpack.c.l.b16 %v74
    %v239 = vunpack.c.l.b16 %v75
    %v240 = vunpack.c.l.b16 %v76
    %v241 = vunpack.c.l.b16 %v77
    %v242 = vunpack.c.l.b16 %v78
    %v243 = vunpack.c.l.b16 %v79
    %v244 = vunpack.c.l.b16 %v80
    %v245 = vunpack.c.l.b16 %v81
    %v246 = vunpack.c.l.b16 %v82
    %v247 = vunpack.c.l.b16 %v83
    %v248 = vunpack.c.l.b16 %v84
    %v249 = vunpack.c.l.b16 %v85
    %v250 = vunpack.c.l.b16 %v86
    %v251 = vunpack.c.l.b16 %v87
    %v252 = vunpack.c.l.b16 %v88
    %v253 = vunpack.c.l.b16 %v89
    %v254 = vunpack.c.l.b16 %v90
    %v255 = vunpack.c.l.b16 %v91
    %v256 = vunpack.c.l.b16 %v92
    %v257 = vpack.c.b16 %v194, %v193
    %v258 = vpack.c.b16 %v196, %v195
    %v259 = vpack.c.b16 %v198, %v197
    %v260 = vpack.c.b16 %v200, %v199
    %v261 = vpack.c.b16 %v202, %v201
    %v262 = vpack.c.b16 %v204, %v203
    %v263 = vpack.c.b16 %v206, %v205
    %v264 = vpack.c.b16 %v208, %v207
    %v265 = vpack.c.b16 %v210, %v209
    %v266 = vpack.c.b16 %v212, %v211
    %v267 = vpack.c.b16 %v214, %v213
    %v268 = vpack.c.b16 %v216, %v215
    %v269 = vpack.c.b16 %v218, %v217
    %v270 = vpack.c.b16 %v220, %v219
    %v271 = vpack.c.b16 %v222, %v221
    %v272 = vpack.c.b16 %v224, %v223
    %v273 = vpack.c.b16 %v226, %v225
    %v274 = vpack.c.b16 %v228, %v227
    %v275 = vpack.c.b16 %v230, %v229
    %v276 = vpack.c.b16 %v232, %v231
    %v277 = vpack.c.b16 %v234, %v233
    %v278 = vpack.c.b16 %v236, %v235
    %v279 = vpack.c.b16 %v238, %v237
    %v280 = vpack.c.b16 %v240, %v239
    %v281 = vpack.c.b16 %v242, %v241
    %v282 = vpack.c.b16 %v244, %v243
    %v283 = vpack.c.b16 %v246, %v245
    %v284 = vpack.c.b16 %v248, %v247
    %v285 = vpack.c.b16 %v250, %v249
    %v286 = vpack.c.b16 %v252, %v251
    %v287 = vpack.c.b16 %v254, %v253
    %v288 = vpack.c.b16 %v256, %v255
    %321 = vmatprep.subr.bf16.mxu0 0
    %322 = vmatpush1.bf16.msra.mxu0 %v257
    %323 = vmatprep.subr.bf16.mxu0 0
    %324 = vmatpush1.bf16.msra.mxu0 %v258
    %325 = vmatprep.subr.bf16.mxu0 0
    %326 = vmatpush1.bf16.msra.mxu0 %v259
    %327 = vmatprep.subr.bf16.mxu0 0
    %328 = vmatpush1.bf16.msra.mxu0 %v260
    %329 = vmatprep.subr.bf16.mxu0 0
    %330 = vmatpush1.bf16.msra.mxu0 %v261
    %331 = vmatprep.subr.bf16.mxu0 0
    %332 = vmatpush1.bf16.msra.mxu0 %v262
    %333 = vmatprep.subr.bf16.mxu0 0
    %334 = vmatpush1.bf16.msra.mxu0 %v263
    %335 = vmatprep.subr.bf16.mxu0 0
    %336 = vmatpush1.bf16.msra.mxu0 %v264
    %337 = vmatprep.subr.bf16.mxu0 0
    %338 = vmatpush1.bf16.msra.mxu0 %v265
    %339 = vmatprep.subr.bf16.mxu0 0
    %340 = vmatpush1.bf16.msra.mxu0 %v266
    %341 = vmatprep.subr.bf16.mxu0 0
    %342 = vmatpush1.bf16.msra.mxu0 %v267
    %343 = vmatprep.subr.bf16.mxu0 0
    %344 = vmatpush1.bf16.msra.mxu0 %v268
    %345 = vmatprep.subr.bf16.mxu0 0
    %346 = vmatpush1.bf16.msra.mxu0 %v269
    %347 = vmatprep.subr.bf16.mxu0 0
    %348 = vmatpush1.bf16.msra.mxu0 %v270
    %349 = vmatprep.subr.bf16.mxu0 0
    %350 = vmatpush1.bf16.msra.mxu0 %v271
    %351 = vmatprep.subr.bf16.mxu0 0
    %352 = vmatpush1.bf16.msra.mxu0 %v272
    %353 = vmatprep.mubr.bf16.mxu0 %v122
    %354 = vmatmul.mubr.bf16.gmra.mrb[0].mxu0 %v115
    %v355 = vpop.f32.mrb[0].mxu0
    %v356 = vadd.f32 %v98, %v355
    %v357 = vpop.f32.mrb[0].mxu0
    %v358 = vpop.f32.mrb[0].mxu0
    %v359 = vpop.f32.mrb[0].mxu0
    %360 = vdwg.mxu0
    %361 = vmatprep.subr.bf16.mxu0 0
    %362 = vmatpush1.bf16.msra.mxu0 %v273
    %363 = vmatprep.subr.bf16.mxu0 0
    %364 = vmatpush1.bf16.msra.mxu0 %v274
    %365 = vmatprep.subr.bf16.mxu0 0
    %366 = vmatpush1.bf16.msra.mxu0 %v275
    %367 = vmatprep.subr.bf16.mxu0 0
    %368 = vmatpush1.bf16.msra.mxu0 %v276
    %369 = vmatprep.subr.bf16.mxu0 0
    %370 = vmatpush1.bf16.msra.mxu0 %v277
    %371 = vmatprep.subr.bf16.mxu0 0
    %372 = vmatpush1.bf16.msra.mxu0 %v278
    %373 = vmatprep.subr.bf16.mxu0 0
    %374 = vmatpush1.bf16.msra.mxu0 %v279
    %375 = vmatprep.subr.bf16.mxu0 0
    %376 = vmatpush1.bf16.msra.mxu0 %v280
    %377 = vmatprep.subr.bf16.mxu0 0
    %378 = vmatpush1.bf16.msra.mxu0 %v281
    %379 = vmatprep.subr.bf16.mxu0 0
    %380 = vmatpush1.bf16.msra.mxu0 %v282
    %381 = vmatprep.subr.bf16.mxu0 0
    %382 = vmatpush1.bf16.msra.mxu0 %v283
    %383 = vmatprep.subr.bf16.mxu0 0
    %384 = vmatpush1.bf16.msra.mxu0 %v284
    %385 = vmatprep.subr.bf16.mxu0 0
    %386 = vmatpush1.bf16.msra.mxu0 %v285
    %387 = vmatprep.subr.bf16.mxu0 0
    %388 = vmatpush1.bf16.msra.mxu0 %v286
    %389 = vmatprep.subr.bf16.mxu0 0
    %390 = vmatpush1.bf16.msra.mxu0 %v287
    %391 = vmatprep.subr.bf16.mxu0 0
    %392 = vmatpush1.bf16.msra.mxu0 %v288
    %393 = vmatprep.mubr.bf16.mxu0 %v124
    %394 = vmatmul.mubr.bf16.gmra.mrb[0].mxu0 %v123
    %v395 = vpop.f32.mrb[0].mxu0
    %v396 = vadd.f32 %v356, %v395
    %v397 = vpop.f32.mrb[0].mxu0
    %v398 = vpop.f32.mrb[0].mxu0
    %v399 = vpop.f32.mrb[0].mxu0
    %400 = vdwg.mxu0
    %v401 = vmax.f32 %v396, 0.0
    %v402 = vpack.c.bf16 %v401, %v401
    %v403 = vld [vmem:[%s3] sm:$0xf]
    %v404 = vld [vmem:[%s3 + $0x4] sm:$0xf]
    %v405 = vld [vmem:[%s3 + $0x8] sm:$0xf]
    %v406 = vld [vmem:[%s3 + $0xc] sm:$0xf]
    %v407 = vld [vmem:[%s3 + $0x10] sm:$0xf]
    %v408 = vld [vmem:[%s3 + $0x14] sm:$0xf]
    %v409 = vld [vmem:[%s3 + $0x18] sm:$0xf]
    %v410 = vld [vmem:[%s3 + $0x1c] sm:$0xf]
    %v411 = vld [vmem:[%s3 + $0x20] sm:$0xf]
    %v412 = vld [vmem:[%s3 + $0x24] sm:$0xf]
    %v413 = vld [vmem:[%s3 + $0x28] sm:$0xf]
    %v414 = vld [vmem:[%s3 + $0x2c] sm:$0xf]
    %v415 = vld [vmem:[%s3 + $0x30] sm:$0xf]
    %v416 = vld [vmem:[%s3 + $0x34] sm:$0xf]
    %v417 = vld [vmem:[%s3 + $0x38] sm:$0xf]
    %v418 = vld [vmem:[%s3 + $0x3c] sm:$0xf]
    %v419 = vld [vmem:[%s4] sm:$0x1]
    %v421 = vlaneseq
    %v422 = vshrl.u32 %v421, 7
    %v423 = vsub.s32 0, %v422
    %v424 = vrot.slane %v419, %v423
    %v442 = vunpack.c.l.b16 %v403
    %v443 = vunpack.c.l.b16 %v404
    %v444 = vunpack.c.l.b16 %v405
    %v445 = vunpack.c.l.b16 %v406
    %v446 = vunpack.c.l.b16 %v407
    %v447 = vunpack.c.l.b16 %v408
    %v448 = vunpack.c.l.b16 %v409
    %v449 = vunpack.c.l.b16 %v410
    %v450 = vunpack.c.l.b16 %v411
    %v451 = vunpack.c.l.b16 %v412
    %v452 = vunpack.c.l.b16 %v413
    %v453 = vunpack.c.l.b16 %v414
    %v454 = vunpack.c.l.b16 %v415
    %v455 = vunpack.c.l.b16 %v416
    %v456 = vunpack.c.l.b16 %v417
    %v457 = vunpack.c.l.b16 %v418
    %v458 = vpack.c.b16 %v443, %v442
    %v459 = vpack.c.b16 %v445, %v444
    %v460 = vpack.c.b16 %v447, %v446
    %v461 = vpack.c.b16 %v449, %v448
    %v462 = vpack.c.b16 %v451, %v450
    %v463 = vpack.c.b16 %v453, %v452
    %v464 = vpack.c.b16 %v455, %v454
    %v465 = vpack.c.b16 %v457, %v456
    %474 = vmatprep.subr.bf16.mxu0 0
    %475 = vmatpush1.bf16.msra.mxu0 %v458
    %476 = vmatprep.subr.bf16.mxu0 0
    %477 = vmatpush1.bf16.msra.mxu0 %v459
    %478 = vmatprep.subr.bf16.mxu0 0
    %479 = vmatpush1.bf16.msra.mxu0 %v460
    %480 = vmatprep.subr.bf16.mxu0 0
    %481 = vmatpush1.bf16.msra.mxu0 %v461
    %482 = vmatprep.subr.bf16.mxu0 0
    %483 = vmatpush1.bf16.msra.mxu0 %v462
    %484 = vmatprep.subr.bf16.mxu0 0
    %485 = vmatpush1.bf16.msra.mxu0 %v463
    %486 = vmatprep.subr.bf16.mxu0 0
    %487 = vmatpush1.bf16.msra.mxu0 %v464
    %488 = vmatprep.subr.bf16.mxu0 0
    %489 = vmatpush1.bf16.msra.mxu0 %v465
    %490 = vmatprep.subr.bf16.mxu0 0
    %491 = vmatpush1.bf16.msra.mxu0 0
    %492 = vmatprep.subr.bf16.mxu0 0
    %493 = vmatpush1.bf16.msra.mxu0 0
    %494 = vmatprep.subr.bf16.mxu0 0
    %495 = vmatpush1.bf16.msra.mxu0 0
    %496 = vmatprep.subr.bf16.mxu0 0
    %497 = vmatpush1.bf16.msra.mxu0 0
    %498 = vmatprep.subr.bf16.mxu0 0
    %499 = vmatpush1.bf16.msra.mxu0 0
    %500 = vmatprep.subr.bf16.mxu0 0
    %501 = vmatpush1.bf16.msra.mxu0 0
    %502 = vmatprep.subr.bf16.mxu0 0
    %503 = vmatpush1.bf16.msra.mxu0 0
    %504 = vmatprep.subr.bf16.mxu0 0
    %505 = vmatpush1.bf16.msra.mxu0 0
    %506 = vmatprep.mubr.bf16.mxu0 0
    %507 = vmatmul.mubr.bf16.gmra.mrb[0].mxu0 %v402
    %v508 = vpop.f32.mrb[0].mxu0
    %v509 = vadd.f32 %v424, %v508
    %v510 = vpop.f32.mrb[0].mxu0
    %v511 = vpop.f32.mrb[0].mxu0
    %v512 = vpop.f32.mrb[0].mxu0
    %513 = vdwg.mxu0
    %v514 = vmax.f32 %v509, 0.0
    %v515 = vpack.c.bf16 %v514, %v514
    %v516 = vld [vmem:[%s5] sm:$0xf]
    %v517 = vld [vmem:[%s5 + $0x4] sm:$0xf]
    %v518 = vld [vmem:[%s5 + $0x8] sm:$0xf]
    %v519 = vld [vmem:[%s5 + $0xc] sm:$0xf]
    %v520 = vld [vmem:[%s5 + $0x10] sm:$0xf]
    %v521 = vld [vmem:[%s5 + $0x14] sm:$0xf]
    %v522 = vld [vmem:[%s5 + $0x18] sm:$0xf]
    %v523 = vld [vmem:[%s5 + $0x1c] sm:$0xf]
    %v524 = vld [vmem:[%s5 + $0x20] sm:$0xf]
    %v525 = vld [vmem:[%s5 + $0x24] sm:$0xf]
    %v526 = vld [vmem:[%s5 + $0x28] sm:$0xf]
    %v527 = vld [vmem:[%s5 + $0x2c] sm:$0xf]
    %v528 = vld [vmem:[%s5 + $0x30] sm:$0xf]
    %v529 = vld [vmem:[%s5 + $0x34] sm:$0xf]
    %v530 = vld [vmem:[%s5 + $0x38] sm:$0xf]
    %v531 = vld [vmem:[%s5 + $0x3c] sm:$0xf]
    %v532 = vld [vmem:[%s6] sm:$0x1]
    %v534 = vlaneseq
    %v535 = vshrl.u32 %v534, 7
    %v536 = vsub.s32 0, %v535
    %v537 = vrot.slane %v532, %v536
    %v555 = vunpack.c.l.b16 %v516
    %v556 = vunpack.c.l.b16 %v517
    %v557 = vunpack.c.l.b16 %v518
    %v558 = vunpack.c.l.b16 %v519
    %v559 = vunpack.c.l.b16 %v520
    %v560 = vunpack.c.l.b16 %v521
    %v561 = vunpack.c.l.b16 %v522
    %v562 = vunpack.c.l.b16 %v523
    %v563 = vunpack.c.l.b16 %v524
    %v564 = vunpack.c.l.b16 %v525
    %v565 = vunpack.c.l.b16 %v526
    %v566 = vunpack.c.l.b16 %v527
    %v567 = vunpack.c.l.b16 %v528
    %v568 = vunpack.c.l.b16 %v529
    %v569 = vunpack.c.l.b16 %v530
    %v570 = vunpack.c.l.b16 %v531
    %v571 = vpack.c.b16 %v556, %v555
    %v572 = vpack.c.b16 %v558, %v557
    %v573 = vpack.c.b16 %v560, %v559
    %v574 = vpack.c.b16 %v562, %v561
    %v575 = vpack.c.b16 %v564, %v563
    %v576 = vpack.c.b16 %v566, %v565
    %v577 = vpack.c.b16 %v568, %v567
    %v578 = vpack.c.b16 %v570, %v569
    %587 = vmatprep.subr.bf16.mxu0 0
    %588 = vmatpush1.bf16.msra.mxu0 %v571
    %589 = vmatprep.subr.bf16.mxu0 0
    %590 = vmatpush1.bf16.msra.mxu0 %v572
    %591 = vmatprep.subr.bf16.mxu0 0
    %592 = vmatpush1.bf16.msra.mxu0 %v573
    %593 = vmatprep.subr.bf16.mxu0 0
    %594 = vmatpush1.bf16.msra.mxu0 %v574
    %595 = vmatprep.subr.bf16.mxu0 0
    %596 = vmatpush1.bf16.msra.mxu0 %v575
    %597 = vmatprep.subr.bf16.mxu0 0
    %598 = vmatpush1.bf16.msra.mxu0 %v576
    %599 = vmatprep.subr.bf16.mxu0 0
    %600 = vmatpush1.bf16.msra.mxu0 %v577
    %601 = vmatprep.subr.bf16.mxu0 0
    %602 = vmatpush1.bf16.msra.mxu0 %v578
    %603 = vmatprep.subr.bf16.mxu0 0
    %604 = vmatpush1.bf16.msra.mxu0 0
    %605 = vmatprep.subr.bf16.mxu0 0
    %606 = vmatpush1.bf16.msra.mxu0 0
    %607 = vmatprep.subr.bf16.mxu0 0
    %608 = vmatpush1.bf16.msra.mxu0 0
    %609 = vmatprep.subr.bf16.mxu0 0
    %610 = vmatpush1.bf16.msra.mxu0 0
    %611 = vmatprep.subr.bf16.mxu0 0
    %612 = vmatpush1.bf16.msra.mxu0 0
    %613 = vmatprep.subr.bf16.mxu0 0
    %614 = vmatpush1.bf16.msra.mxu0 0
    %615 = vmatprep.subr.bf16.mxu0 0
    %616 = vmatpush1.bf16.msra.mxu0 0
    %617 = vmatprep.subr.bf16.mxu0 0
    %618 = vmatpush1.bf16.msra.mxu0 0
    %619 = vmatprep.mubr.bf16.mxu0 0
    %620 = vmatmul.mubr.bf16.gmra.mrb[0].mxu0 %v515
    %v621 = vpop.f32.mrb[0].mxu0
    %v622 = vadd.f32 %v537, %v621
    %v623 = vpop.f32.mrb[0].mxu0
    %v624 = vpop.f32.mrb[0].mxu0
    %v625 = vpop.f32.mrb[0].mxu0
    %626 = vdwg.mxu0
    %627 = vst [vmem:[#allocation2] sm:$0x3] %v622
    // Predicated region
    $region30: #{lenet_forward.5} parent=1 // pred_check
      _
    $region31: #{lenet_forward.5} parent=1 // pred_check_branch
      %629 = sbr.rel (0) target = $region33
    $region32: #{lenet_forward.5} parent=1 // pred_region
      %s631 = ssub.s32 32, 32
      %632 = vsyncadd [#allocation3], %s631
      %s634 = sshll.u32 [#allocation2], 4
      %s635 = int_to_ptr.vmem [resolvable:$true] %s634
      %637 = dma.vmem_to_hbm [thread:$0]  %s635, 32, %s7, [#allocation3]
    $region33: #{lenet_forward.5} parent=1 // pred_fallthru
      _
    // Predicated region
    $region34: #{lenet_forward.5} parent=1 // pred_check
      _
    $region35: #{lenet_forward.5} parent=1 // pred_check_branch
      %639 = sbr.rel (0) target = $region37
    $region36: #{lenet_forward.5} parent=1 // pred_region
      %640 = dma.done [#allocation3], 32
    $region37: #{lenet_forward.5} parent=1 // pred_fallthru
      _
    %641 = vsyncpa [#allocation3], 1

</llo_original>
